<compile_context>
chip_gen: v7x
topology: tpu7x:2x2x1
jax: 0.10.0
libtpu: 0.0.40
codegen_flags: <defaults>
</compile_context>

<pallas_src>
import functools
import math

import jax
import jax.numpy as jnp
from jax import lax
from jax.experimental import pallas as pl
from jax.experimental.pallas import tpu as pltpu

INFINITY_NUMBER = 1e12   # stand-in for word.INFINITY_NUMBER
LEAKY_SLOPE = 0.2        # nn.LeakyReLU(0.2)


def _hgat_core_kernel(srel_ref, stgt_ref, ssrc_ref, neg_ref, val_ref, xt_ref, fbias_ref,
                      out_ref, attn_ref, *, num_heads, d_v):
    """Fused masked-softmax attention core for one (batch, target-row tile) grid step.

    srel_ref : (H, 1, TI, Lp) f32   per-head relation scores (lane-dense planes)
    stgt_ref : (1, TI, H)     f32   per-head target scores (+ folded relation-Linear bias)
    ssrc_ref : (1, H, Lp)     f32   per-head source scores (pre-transposed in the wrapper)
    neg_ref  : (1, H, TI, Lp) bf16  additive mask bias (0 = keep, -INF = padded/no edge)
    val_ref  : (1, Lp, D)     bf16  value projection of all source rows
    xt_ref   : (1, TI, D)     f32   input rows of this tile (residual)
    fbias_ref: (1, D)         f32   final bias
    out_ref  : (1, TI, D)     f32
    attn_ref : (1, H, TI, Lp) f32
    """
    H, dv = num_heads, d_v

    val = val_ref[0]                                   # (Lp, D)  bf16
    stgt = stgt_ref[0]                                 # (TI, H)  f32
    ssrc = ssrc_ref[0]                                 # (H, Lp)  f32

    for h in range(H):                                 # H is small; all ops are (TI, Lp) tiles
        scores = stgt[:, h:h + 1] + ssrc[h:h + 1, :] + srel_ref[h, 0]        # (TI, Lp)
        scores = jnp.where(scores >= 0.0, scores, LEAKY_SLOPE * scores)      # LeakyReLU(0.2)
        scores = scores + neg_ref[0, h].astype(jnp.float32)                  # masked_fill(-INF)

        # stable softmax over keys j (full-tile)
        m = jnp.max(scores, axis=-1, keepdims=True)
        e = jnp.exp(scores - m)
        inv = pl.reciprocal(jnp.sum(e, axis=-1, keepdims=True))              # exact
        attn = e * inv
        attn = jnp.where(scores < -0.5 * INFINITY_NUMBER, 0.0, attn)         # masked_fill(0)

        attn_ref[0, h] = attn                                                # whole-tile store

        # attn @ value for this head's columns -> written straight into the output tile
        out_ref[0, :, h * dv:(h + 1) * dv] = jnp.dot(
            attn.astype(jnp.bfloat16), val[:, h * dv:(h + 1) * dv],
            preferred_element_type=jnp.float32)                              # (TI, dv)

    # residual + final_bias (activation is None in this config)
    out_ref[0] = out_ref[0] + xt_ref[0] + fbias_ref[...]


def _head_block_matrix(w_flat, num_heads, d_v):
    """Head-major (D,) score vector -> (D, H) block matrix: M[d, h] = w[d] iff d // d_v == h."""
    D = num_heads * d_v
    head_of_d = jnp.arange(D, dtype=jnp.int32) // d_v
    onehot = head_of_d[:, None] == jnp.arange(num_heads, dtype=jnp.int32)[None, :]
    return jnp.where(onehot, w_flat.reshape(D, 1), 0.0).astype(jnp.float32)


def _round_up(x, m):
    return -(-x // m) * m


def _choose_tiling(batch, L, D, H, vmem_limit):
    """Row-tile TI (multiple of 32 dividing Lp) and padded sequence length Lp."""
    lp32 = _round_up(L, 32)
    lp128 = _round_up(L, 128)
    # fully lane-dense key dim when the (quadratic) padding overhead stays small
    Lp = lp128 if lp128 * lp128 <= 1.15 * lp32 * lp32 else lp32

    per_row = (2 * H * Lp * 4        # s_rel tile (f32, double-buffered)
               + 2 * H * Lp * 2      # additive mask tile (bf16)
               + 2 * H * Lp * 4      # attn output tile (f32)
               + 5 * Lp * 4          # in-kernel softmax intermediates (compiler spill)
               + 4 * D * 4 + 2 * H * 4)
    fixed = 2 * Lp * D * 2 + 2 * H * Lp * 4 + 16 * D * (H + 2) + (1 << 20)
    budget = int(vmem_limit * 0.6)

    ti = max(32, (budget - fixed) // per_row)
    ti = max(32, (ti // 32) * 32)
    ti = min(ti, Lp)
    if batch == 1 and Lp >= 64:
        # single-batch call: force >=2 row tiles so both v7x TensorCores get a parallel slice
        ti = min(ti, max(32, ((Lp // 2) // 32) * 32))

    # largest multiple-of-32 divisor of Lp not exceeding ti
    m = Lp // 32
    best = 1
    for k in range(1, m + 1):
        if m % k == 0 and 32 * k <= ti:
            best = k
    return 32 * best, Lp


@functools.partial(jax.jit, static_argnames=("num_heads",))
def heterogeneous_gat(inp, relation_inp, mask, adj_mask, params, *, num_heads):
    B, L, D = inp.shape
    H = num_heads
    assert D % H == 0
    dv = D // H

    inp = inp.astype(jnp.float32)
    relation_inp = relation_inp.astype(jnp.float32)

    # generation-aware VMEM budget (v5e/v6e: 128 MiB, v7x: 64 MiB)
    try:
        vmem_cap = int(pltpu.get_tpu_info().vmem_capacity_bytes)
    except Exception:
        vmem_cap = 64 * 1024 * 1024
    vmem_limit = int(vmem_cap * 0.75)

    TI, Lp = _choose_tiling(B, L, D, H, vmem_limit)
    n_tiles = Lp // TI
    pad = Lp - L

    # fold the (1,1,1,H,d_v) score vectors into (D, H) block matrices ...
    w_src_mat = _head_block_matrix(params["w_src"].reshape(-1), H, dv)      # (D, H)
    w_tgt_mat = _head_block_matrix(params["w_tgt"].reshape(-1), H, dv)      # (D, H)
    w_rel_mat = _head_block_matrix(params["w_rel"].reshape(-1), H, dv)      # (D, H)
    # ... and fold the relation Linear into the relation-score projection.
    w_rel_eff = params["wr"] @ w_rel_mat                                    # (D, H)
    b_rel_eff = params["br"] @ w_rel_mat                                    # (1, H)

    # ---- hoisted, grid-invariant projections (computed once, not per row tile) ----
    val = inp @ params["wv"] + params["bv"]                                 # (B, L, D) f32
    s_src = jnp.transpose(val @ w_src_mat, (0, 2, 1))                       # (B, H, L)
    s_tgt = val @ w_tgt_mat + b_rel_eff                                     # (B, L, H) (+rel bias)
    val_bf = val.astype(jnp.bfloat16)

    # relation scores for all heads in one matmul: (H, D) x (B, L, L, D) -> (H, B, L, L)
    s_rel = lax.dot_general(jnp.transpose(w_rel_eff), relation_inp,
                            dimension_numbers=(((1,), (3,)), ((), ())),
                            preferred_element_type=jnp.float32)             # (H, B, L, L)

    # combined additive mask bias: 0 = keep, -INF = padded key OR missing edge (bf16 stream)
    bad = jnp.logical_or(mask.astype(bool)[:, None, :, :],
                         jnp.logical_not(adj_mask.astype(bool)))            # (B, H, L, L)
    neg = jnp.where(bad, -INFINITY_NUMBER, 0.0).astype(jnp.bfloat16)

    inp_p = inp
    if pad:
        # only the small per-head tensors get padded; relation_inp itself is never padded
        val_bf = jnp.pad(val_bf, ((0, 0), (0, pad), (0, 0)))
        inp_p = jnp.pad(inp_p, ((0, 0), (0, pad), (0, 0)))
        s_src = jnp.pad(s_src, ((0, 0), (0, 0), (0, pad)))
        s_tgt = jnp.pad(s_tgt, ((0, 0), (0, pad), (0, 0)))
        s_rel = jnp.pad(s_rel, ((0, 0), (0, 0), (0, pad), (0, pad)))
        neg = jnp.pad(neg, ((0, 0), (0, 0), (0, pad), (0, pad)),
                      constant_values=-INFINITY_NUMBER)

    kernel = functools.partial(_hgat_core_kernel, num_heads=H, d_v=dv)

    in_specs = [
        pl.BlockSpec((H, 1, TI, Lp), lambda b, it: (0, b, it, 0)),   # s_rel per-head planes
        pl.BlockSpec((1, TI, H), lambda b, it: (b, it, 0)),          # s_tgt (+relation bias)
        pl.BlockSpec((1, H, Lp), lambda b, it: (b, 0, 0)),           # s_src (pre-transposed)
        pl.BlockSpec((1, H, TI, Lp), lambda b, it: (b, 0, it, 0)),   # additive mask (bf16)
        pl.BlockSpec((1, Lp, D), lambda b, it: (b, 0, 0)),           # value rows (bf16)
        pl.BlockSpec((1, TI, D), lambda b, it: (b, it, 0)),          # inp rows (residual)
        pl.BlockSpec((1, D), lambda b, it: (0, 0)),                  # final_bias
    ]
    out_specs = (
        pl.BlockSpec((1, TI, D), lambda b, it: (b, it, 0)),          # final_output tile
        pl.BlockSpec((1, H, TI, Lp), lambda b, it: (b, 0, it, 0)),   # attn tile
    )
    out_shape = (
        jax.ShapeDtypeStruct((B, Lp, D), jnp.float32),
        jax.ShapeDtypeStruct((B, H, Lp, Lp), jnp.float32),
    )

    out_p, attn_p = pl.pallas_call(
        kernel,
        grid=(B, n_tiles),
        in_specs=in_specs,
        out_specs=out_specs,
        out_shape=out_shape,
        compiler_params=pltpu.CompilerParams(
            dimension_semantics=("parallel", "parallel"),
            vmem_limit_bytes=vmem_limit),
    )(s_rel, s_tgt, s_src, neg, val_bf, inp_p, params["final_bias"])

    final_out = out_p[:, :L, :]
    attn = attn_p[:, :, :L, :L]
    attn_per_head = [attn[:, h] for h in range(H)]    # like attn.chunk(H, dim=1).squeeze(1)
    return final_out, attn_per_head


def init_params(key, model_dim, num_heads):
    D = model_dim
    ks = jax.random.split(key, 8)

    def xavier(k, shape, fan_in, fan_out):
        bound = math.sqrt(6.0 / (fan_in + fan_out))
        return jax.random.uniform(k, shape, jnp.float32, -bound, bound)

    lin_b = 1.0 / math.sqrt(D)
    return {
        "wv": xavier(ks[0], (D, D), D, D),                                    # value.weight^T
        "bv": jax.random.uniform(ks[1], (1, D), jnp.float32, -lin_b, lin_b),  # value.bias
        "wr": xavier(ks[2], (D, D), D, D),                                    # relation.weight^T
        "br": jax.random.uniform(ks[3], (1, D), jnp.float32, -lin_b, lin_b),  # relation.bias
        # torch shape (1,1,1,H,d_v), flattened head-major to (1, D)
        "w_src": xavier(ks[4], (1, D), D, D),
        "w_tgt": xavier(ks[5], (1, D), D, D),
        "w_rel": xavier(ks[6], (1, D), D, D),
        "final_bias": jnp.zeros((1, D), jnp.float32),                         # zeros_ init
    }


def _reference(inp, relation_inp, mask, adj_mask, params, *, num_heads):
    """Pure-JAX mirror of the torch forward (relation_inp branch)."""
    B, L, D = inp.shape
    H = num_heads
    dv = D // H
    val = inp @ params["wv"] + params["bv"]                                   # (B, L, D)
    value = val.reshape(B, L, H, dv).transpose(0, 2, 1, 3)                    # (B, H, L, dv)
    relation = (relation_inp @ params["wr"] + params["br"]).reshape(B, L, L, H, dv)
    w_src = params["w_src"].reshape(H, dv)
    w_tgt = params["w_tgt"].reshape(H, dv)
    w_rel = params["w_rel"].reshape(H, dv)
    sc_src = jnp.einsum("bhjd,hd->bjh", value, w_src)                         # (B, Lj, H)
    sc_tgt = jnp.einsum("bhid,hd->bih", value, w_tgt)                         # (B, Li, H)
    sc_rel = jnp.einsum("bijhd,hd->bijh", relation, w_rel)                    # (B, Li, Lj, H)
    scores = sc_tgt[:, :, None, :] + sc_src[:, None, :, :] + sc_rel
    scores = jnp.transpose(scores, (0, 3, 1, 2))                              # (B, H, L, L)
    scores = jnp.where(scores >= 0.0, scores, LEAKY_SLOPE * scores)
    maskb = mask.astype(bool)[:, None, :, :]
    adjb = adj_mask.astype(bool)
    scores = jnp.where(maskb, -INFINITY_NUMBER, scores)
    scores = jnp.where(~adjb, -INFINITY_NUMBER, scores)
    attn = jax.nn.softmax(scores, axis=-1)
    attn = jnp.where(maskb, 0.0, attn)
    attn = jnp.where(~adjb, 0.0, attn)
    out = jnp.einsum("bhij,bhjd->bhid", attn, value)
    out = out.transpose(0, 2, 1, 3).reshape(B, L, D)
    final = out + inp + params["final_bias"].reshape(1, 1, D)
    return final, attn


if __name__ == "__main__":
    B, L, D, H = 2, 8, 32, 4
    key = jax.random.PRNGKey(0)
    k_inp, k_rel, k_adj, k_par = jax.random.split(key, 4)

    inp = jax.random.normal(k_inp, (B, L, D), jnp.float32)
    relation_inp = jax.random.normal(k_rel, (B, L, L, D), jnp.float32)

    lengths = jnp.array([L, L - 2], jnp.int32)
    key_pad = jnp.arange(L)[None, :] >= lengths[:, None]          # (B, L) True = padded key
    mask = jnp.broadcast_to(key_pad[:, None, :], (B, L, L))       # (B, L, L) bool
    adj = (jax.random.uniform(k_adj, (B, H, L, L)) > 0.4).astype(jnp.float32)
    adj = jnp.maximum(adj, jnp.eye(L, dtype=jnp.float32)[None, None, :, :])   # keep self-loops

    params = init_params(k_par, D, H)

    final_out, attn_per_head = heterogeneous_gat(
        inp, relation_inp, mask, adj, params, num_heads=H)
    final_out = jax.block_until_ready(final_out)

    assert final_out.shape == (B, L, D)
    assert len(attn_per_head) == H and attn_per_head[0].shape == (B, L, L)
    assert bool(jnp.all(jnp.isfinite(final_out)))

    # numerical check against the pure-JAX reference (loose tol: bf16 MXU value path)
    ref_out, ref_attn = _reference(inp, relation_inp, mask, adj, params, num_heads=H)
    attn_stack = jnp.stack(attn_per_head, axis=1)
    out_err = float(jnp.max(jnp.abs(final_out - ref_out)))
    attn_err = float(jnp.max(jnp.abs(attn_stack - ref_attn)))
    assert out_err < 0.1, f"output mismatch: {out_err}"
    assert attn_err < 0.05, f"attention mismatch: {attn_err}"

    print("KERNEL_OK")
</pallas_src>

<mosaic_0001>
module attributes {stable_mosaic.version = 11 : i64} {
  func.func @_hgat_core_kernel(%arg0: i32, %arg1: i32, %arg2: memref<4x1x32x32xf32, #tpu.memory_space<vmem>>, %arg3: memref<1x32x4xf32, #tpu.memory_space<vmem>>, %arg4: memref<1x4x32xf32, #tpu.memory_space<vmem>>, %arg5: memref<1x4x32x32xbf16, #tpu.memory_space<vmem>>, %arg6: memref<1x32x32xbf16, #tpu.memory_space<vmem>>, %arg7: memref<1x32x32xf32, #tpu.memory_space<vmem>>, %arg8: memref<1x32xf32, #tpu.memory_space<vmem>>, %arg9: memref<1x32x32xf32, #tpu.memory_space<vmem>>, %arg10: memref<1x4x32x32xf32, #tpu.memory_space<vmem>>) attributes {dimension_semantics = [#tpu.dimension_semantics<parallel>, #tpu.dimension_semantics<parallel>], iteration_bounds = array<i64: 2, 1>, scalar_prefetch = 0 : i64, scratch_operands = 0 : i64, tpu.core_type = #tpu.core_type<tc>, window_params = [{transform_indices = @transform_0, window_bounds = array<i64: 4, 1, 32, 32>}, {transform_indices = @transform_1, window_bounds = array<i64: 1, 32, 4>}, {transform_indices = @transform_2, window_bounds = array<i64: 1, 4, 32>}, {transform_indices = @transform_3, window_bounds = array<i64: 1, 4, 32, 32>}, {transform_indices = @transform_4, window_bounds = array<i64: 1, 32, 32>}, {transform_indices = @transform_5, window_bounds = array<i64: 1, 32, 32>}, {pipeline_mode = #tpu.pipeline_mode<synchronous>, transform_indices = @transform_6, window_bounds = array<i64: 1, 32>}, {transform_indices = @transform_7, window_bounds = array<i64: 1, 32, 32>}, {transform_indices = @transform_8, window_bounds = array<i64: 1, 4, 32, 32>}]} {
    %c0 = arith.constant 0 : index
    %c0_0 = arith.constant 0 : index
    %c0_1 = arith.constant 0 : index
    %0 = vector.load %arg6[%c0, %c0_0, %c0_1] : memref<1x32x32xbf16, #tpu.memory_space<vmem>>, vector<1x32x32xbf16>
    %1 = vector.shape_cast %0 : vector<1x32x32xbf16> to vector<32x32xbf16>
    %c0_2 = arith.constant 0 : index
    %c0_3 = arith.constant 0 : index
    %c0_4 = arith.constant 0 : index
    %2 = vector.load %arg3[%c0_2, %c0_3, %c0_4] : memref<1x32x4xf32, #tpu.memory_space<vmem>>, vector<1x32x4xf32>
    %3 = vector.shape_cast %2 : vector<1x32x4xf32> to vector<32x4xf32>
    %c0_5 = arith.constant 0 : index
    %c0_6 = arith.constant 0 : index
    %c0_7 = arith.constant 0 : index
    %4 = vector.load %arg4[%c0_5, %c0_6, %c0_7] : memref<1x4x32xf32, #tpu.memory_space<vmem>>, vector<1x4x32xf32>
    %5 = vector.shape_cast %4 : vector<1x4x32xf32> to vector<4x32xf32>
    %6 = vector.extract_strided_slice %3 {offsets = [0, 0], sizes = [32, 1], strides = [1, 1]} : vector<32x4xf32> to vector<32x1xf32>
    %7 = vector.extract_strided_slice %5 {offsets = [0, 0], sizes = [1, 32], strides = [1, 1]} : vector<4x32xf32> to vector<1x32xf32>
    %8 = vector.broadcast %6 : vector<32x1xf32> to vector<32x32xf32>
    %9 = vector.broadcast %7 : vector<1x32xf32> to vector<32x32xf32>
    %10 = arith.addf %8, %9 : vector<32x32xf32>
    %c0_8 = arith.constant 0 : index
    %c0_9 = arith.constant 0 : index
    %c0_10 = arith.constant 0 : index
    %c0_11 = arith.constant 0 : index
    %11 = vector.load %arg2[%c0_8, %c0_9, %c0_10, %c0_11] : memref<4x1x32x32xf32, #tpu.memory_space<vmem>>, vector<1x1x32x32xf32>
    %12 = vector.shape_cast %11 : vector<1x1x32x32xf32> to vector<32x32xf32>
    %13 = arith.addf %10, %12 : vector<32x32xf32>
    %cst = arith.constant 0.000000e+00 : f32
    %14 = vector.broadcast %cst : f32 to vector<32x32xf32>
    %15 = arith.cmpf oge, %13, %14 : vector<32x32xf32>
    %cst_12 = arith.constant 2.000000e-01 : f32
    %16 = vector.broadcast %cst_12 : f32 to vector<32x32xf32>
    %17 = arith.mulf %16, %13 : vector<32x32xf32>
    %18 = arith.select %15, %13, %17 : vector<32x32xi1>, vector<32x32xf32>
    %c0_13 = arith.constant 0 : index
    %c0_14 = arith.constant 0 : index
    %c0_15 = arith.constant 0 : index
    %c0_16 = arith.constant 0 : index
    %19 = vector.load %arg5[%c0_13, %c0_14, %c0_15, %c0_16] : memref<1x4x32x32xbf16, #tpu.memory_space<vmem>>, vector<1x1x32x32xbf16>
    %20 = vector.shape_cast %19 : vector<1x1x32x32xbf16> to vector<32x32xbf16>
    %21 = arith.extf %20 : vector<32x32xbf16> to vector<32x32xf32>
    %22 = arith.addf %18, %21 : vector<32x32xf32>
    %cst_17 = arith.constant dense<0xFF800000> : vector<32xf32>
    %23 = vector.multi_reduction <maximumf>, %22, %cst_17 [1] : vector<32x32xf32> to vector<32xf32>
    %24 = vector.shape_cast %23 : vector<32xf32> to vector<32x1xf32>
    %25 = vector.broadcast %24 : vector<32x1xf32> to vector<32x32xf32>
    %26 = arith.subf %22, %25 : vector<32x32xf32>
    %27 = math.exp %26 : vector<32x32xf32>
    %cst_18 = arith.constant dense<0.000000e+00> : vector<32xf32>
    %28 = vector.multi_reduction <add>, %27, %cst_18 [1] : vector<32x32xf32> to vector<32xf32>
    %29 = vector.shape_cast %28 : vector<32xf32> to vector<32x1xf32>
    %30 = tpu.reciprocal %29 : vector<32x1xf32> -> vector<32x1xf32>
    %31 = vector.broadcast %30 : vector<32x1xf32> to vector<32x32xf32>
    %32 = arith.mulf %27, %31 : vector<32x32xf32>
    %cst_19 = arith.constant -5.000000e+11 : f32
    %33 = vector.broadcast %cst_19 : f32 to vector<32x32xf32>
    %34 = arith.cmpf olt, %22, %33 : vector<32x32xf32>
    %cst_20 = arith.constant 0.000000e+00 : f32
    %35 = vector.broadcast %cst_20 : f32 to vector<32x32xf32>
    %36 = arith.select %34, %35, %32 : vector<32x32xi1>, vector<32x32xf32>
    %c0_21 = arith.constant 0 : index
    %c0_22 = arith.constant 0 : index
    %c0_23 = arith.constant 0 : index
    %c0_24 = arith.constant 0 : index
    %37 = vector.load %arg10[%c0_21, %c0_22, %c0_23, %c0_24] : memref<1x4x32x32xf32, #tpu.memory_space<vmem>>, vector<1x1x32x32xf32>
    %38 = vector.shape_cast %37 : vector<1x1x32x32xf32> to vector<32x32xf32>
    %39 = vector.shape_cast %36 : vector<32x32xf32> to vector<1x1x32x32xf32>
    tpu.vector_store %arg10[%c0_21, %c0_22, %c0_23, %c0_24], %39 {strides = array<i32>} : memref<1x4x32x32xf32, #tpu.memory_space<vmem>>, vector<1x1x32x32xf32>,
    %40 = arith.truncf %36 : vector<32x32xf32> to vector<32x32xbf16>
    %41 = vector.extract_strided_slice %1 {offsets = [0, 0], sizes = [32, 8], strides = [1, 1]} : vector<32x32xbf16> to vector<32x8xbf16>
    %cst_25 = arith.constant dense<0.000000e+00> : vector<32x8xf32>
    %42 = tpu.matmul %40, %41, %cst_25 {dimension_numbers = #tpu.dot_dimension_numbers<[1], [0], [0], [1], [0, 0, 1, 1], [], []>} : vector<32x32xbf16>, vector<32x8xbf16>, vector<32x8xf32> -> vector<32x8xf32>
    %c0_26 = arith.constant 0 : index
    %c0_27 = arith.constant 0 : index
    %c0_28 = arith.constant 0 : index
    %43 = vector.load %arg9[%c0_26, %c0_27, %c0_28] : memref<1x32x32xf32, #tpu.memory_space<vmem>>, vector<1x32x8xf32>
    %44 = vector.shape_cast %43 : vector<1x32x8xf32> to vector<32x8xf32>
    %45 = vector.shape_cast %42 : vector<32x8xf32> to vector<1x32x8xf32>
    tpu.vector_store %arg9[%c0_26, %c0_27, %c0_28], %45 {strides = array<i32>} : memref<1x32x32xf32, #tpu.memory_space<vmem>>, vector<1x32x8xf32>,
    %46 = vector.extract_strided_slice %3 {offsets = [0, 1], sizes = [32, 1], strides = [1, 1]} : vector<32x4xf32> to vector<32x1xf32>
    %47 = vector.extract_strided_slice %5 {offsets = [1, 0], sizes = [1, 32], strides = [1, 1]} : vector<4x32xf32> to vector<1x32xf32>
    %48 = vector.broadcast %46 : vector<32x1xf32> to vector<32x32xf32>
    %49 = vector.broadcast %47 : vector<1x32xf32> to vector<32x32xf32>
    %50 = arith.addf %48, %49 : vector<32x32xf32>
    %c1 = arith.constant 1 : index
    %c0_29 = arith.constant 0 : index
    %c0_30 = arith.constant 0 : index
    %c0_31 = arith.constant 0 : index
    %51 = vector.load %arg2[%c1, %c0_29, %c0_30, %c0_31] : memref<4x1x32x32xf32, #tpu.memory_space<vmem>>, vector<1x1x32x32xf32>
    %52 = vector.shape_cast %51 : vector<1x1x32x32xf32> to vector<32x32xf32>
    %53 = arith.addf %50, %52 : vector<32x32xf32>
    %cst_32 = arith.constant 0.000000e+00 : f32
    %54 = vector.broadcast %cst_32 : f32 to vector<32x32xf32>
    %55 = arith.cmpf oge, %53, %54 : vector<32x32xf32>
    %cst_33 = arith.constant 2.000000e-01 : f32
    %56 = vector.broadcast %cst_33 : f32 to vector<32x32xf32>
    %57 = arith.mulf %56, %53 : vector<32x32xf32>
    %58 = arith.select %55, %53, %57 : vector<32x32xi1>, vector<32x32xf32>
    %c0_34 = arith.constant 0 : index
    %c1_35 = arith.constant 1 : index
    %c0_36 = arith.constant 0 : index
    %c0_37 = arith.constant 0 : index
    %59 = vector.load %arg5[%c0_34, %c1_35, %c0_36, %c0_37] : memref<1x4x32x32xbf16, #tpu.memory_space<vmem>>, vector<1x1x32x32xbf16>
    %60 = vector.shape_cast %59 : vector<1x1x32x32xbf16> to vector<32x32xbf16>
    %61 = arith.extf %60 : vector<32x32xbf16> to vector<32x32xf32>
    %62 = arith.addf %58, %61 : vector<32x32xf32>
    %cst_38 = arith.constant dense<0xFF800000> : vector<32xf32>
    %63 = vector.multi_reduction <maximumf>, %62, %cst_38 [1] : vector<32x32xf32> to vector<32xf32>
    %64 = vector.shape_cast %63 : vector<32xf32> to vector<32x1xf32>
    %65 = vector.broadcast %64 : vector<32x1xf32> to vector<32x32xf32>
    %66 = arith.subf %62, %65 : vector<32x32xf32>
    %67 = math.exp %66 : vector<32x32xf32>
    %cst_39 = arith.constant dense<0.000000e+00> : vector<32xf32>
    %68 = vector.multi_reduction <add>, %67, %cst_39 [1] : vector<32x32xf32> to vector<32xf32>
    %69 = vector.shape_cast %68 : vector<32xf32> to vector<32x1xf32>
    %70 = tpu.reciprocal %69 : vector<32x1xf32> -> vector<32x1xf32>
    %71 = vector.broadcast %70 : vector<32x1xf32> to vector<32x32xf32>
    %72 = arith.mulf %67, %71 : vector<32x32xf32>
    %cst_40 = arith.constant -5.000000e+11 : f32
    %73 = vector.broadcast %cst_40 : f32 to vector<32x32xf32>
    %74 = arith.cmpf olt, %62, %73 : vector<32x32xf32>
    %cst_41 = arith.constant 0.000000e+00 : f32
    %75 = vector.broadcast %cst_41 : f32 to vector<32x32xf32>
    %76 = arith.select %74, %75, %72 : vector<32x32xi1>, vector<32x32xf32>
    %c0_42 = arith.constant 0 : index
    %c1_43 = arith.constant 1 : index
    %c0_44 = arith.constant 0 : index
    %c0_45 = arith.constant 0 : index
    %77 = vector.load %arg10[%c0_42, %c1_43, %c0_44, %c0_45] : memref<1x4x32x32xf32, #tpu.memory_space<vmem>>, vector<1x1x32x32xf32>
    %78 = vector.shape_cast %77 : vector<1x1x32x32xf32> to vector<32x32xf32>
    %79 = vector.shape_cast %76 : vector<32x32xf32> to vector<1x1x32x32xf32>
    tpu.vector_store %arg10[%c0_42, %c1_43, %c0_44, %c0_45], %79 {strides = array<i32>} : memref<1x4x32x32xf32, #tpu.memory_space<vmem>>, vector<1x1x32x32xf32>,
    %80 = arith.truncf %76 : vector<32x32xf32> to vector<32x32xbf16>
    %81 = vector.extract_strided_slice %1 {offsets = [0, 8], sizes = [32, 8], strides = [1, 1]} : vector<32x32xbf16> to vector<32x8xbf16>
    %cst_46 = arith.constant dense<0.000000e+00> : vector<32x8xf32>
    %82 = tpu.matmul %80, %81, %cst_46 {dimension_numbers = #tpu.dot_dimension_numbers<[1], [0], [0], [1], [0, 0, 1, 1], [], []>} : vector<32x32xbf16>, vector<32x8xbf16>, vector<32x8xf32> -> vector<32x8xf32>
    %c0_47 = arith.constant 0 : index
    %c0_48 = arith.constant 0 : index
    %c8 = arith.constant 8 : index
    %83 = vector.load %arg9[%c0_47, %c0_48, %c8] : memref<1x32x32xf32, #tpu.memory_space<vmem>>, vector<1x32x8xf32>
    %84 = vector.shape_cast %83 : vector<1x32x8xf32> to vector<32x8xf32>
    %85 = vector.shape_cast %82 : vector<32x8xf32> to vector<1x32x8xf32>
    tpu.vector_store %arg9[%c0_47, %c0_48, %c8], %85 {strides = array<i32>} : memref<1x32x32xf32, #tpu.memory_space<vmem>>, vector<1x32x8xf32>,
    %86 = vector.extract_strided_slice %3 {offsets = [0, 2], sizes = [32, 1], strides = [1, 1]} : vector<32x4xf32> to vector<32x1xf32>
    %87 = vector.extract_strided_slice %5 {offsets = [2, 0], sizes = [1, 32], strides = [1, 1]} : vector<4x32xf32> to vector<1x32xf32>
    %88 = vector.broadcast %86 : vector<32x1xf32> to vector<32x32xf32>
    %89 = vector.broadcast %87 : vector<1x32xf32> to vector<32x32xf32>
    %90 = arith.addf %88, %89 : vector<32x32xf32>
    %c2 = arith.constant 2 : index
    %c0_49 = arith.constant 0 : index
    %c0_50 = arith.constant 0 : index
    %c0_51 = arith.constant 0 : index
    %91 = vector.load %arg2[%c2, %c0_49, %c0_50, %c0_51] : memref<4x1x32x32xf32, #tpu.memory_space<vmem>>, vector<1x1x32x32xf32>
    %92 = vector.shape_cast %91 : vector<1x1x32x32xf32> to vector<32x32xf32>
    %93 = arith.addf %90, %92 : vector<32x32xf32>
    %cst_52 = arith.constant 0.000000e+00 : f32
    %94 = vector.broadcast %cst_52 : f32 to vector<32x32xf32>
    %95 = arith.cmpf oge, %93, %94 : vector<32x32xf32>
    %cst_53 = arith.constant 2.000000e-01 : f32
    %96 = vector.broadcast %cst_53 : f32 to vector<32x32xf32>
    %97 = arith.mulf %96, %93 : vector<32x32xf32>
    %98 = arith.select %95, %93, %97 : vector<32x32xi1>, vector<32x32xf32>
    %c0_54 = arith.constant 0 : index
    %c2_55 = arith.constant 2 : index
    %c0_56 = arith.constant 0 : index
    %c0_57 = arith.constant 0 : index
    %99 = vector.load %arg5[%c0_54, %c2_55, %c0_56, %c0_57] : memref<1x4x32x32xbf16, #tpu.memory_space<vmem>>, vector<1x1x32x32xbf16>
    %100 = vector.shape_cast %99 : vector<1x1x32x32xbf16> to vector<32x32xbf16>
    %101 = arith.extf %100 : vector<32x32xbf16> to vector<32x32xf32>
    %102 = arith.addf %98, %101 : vector<32x32xf32>
    %cst_58 = arith.constant dense<0xFF800000> : vector<32xf32>
    %103 = vector.multi_reduction <maximumf>, %102, %cst_58 [1] : vector<32x32xf32> to vector<32xf32>
    %104 = vector.shape_cast %103 : vector<32xf32> to vector<32x1xf32>
    %105 = vector.broadcast %104 : vector<32x1xf32> to vector<32x32xf32>
    %106 = arith.subf %102, %105 : vector<32x32xf32>
    %107 = math.exp %106 : vector<32x32xf32>
    %cst_59 = arith.constant dense<0.000000e+00> : vector<32xf32>
    %108 = vector.multi_reduction <add>, %107, %cst_59 [1] : vector<32x32xf32> to vector<32xf32>
    %109 = vector.shape_cast %108 : vector<32xf32> to vector<32x1xf32>
    %110 = tpu.reciprocal %109 : vector<32x1xf32> -> vector<32x1xf32>
    %111 = vector.broadcast %110 : vector<32x1xf32> to vector<32x32xf32>
    %112 = arith.mulf %107, %111 : vector<32x32xf32>
    %cst_60 = arith.constant -5.000000e+11 : f32
    %113 = vector.broadcast %cst_60 : f32 to vector<32x32xf32>
    %114 = arith.cmpf olt, %102, %113 : vector<32x32xf32>
    %cst_61 = arith.constant 0.000000e+00 : f32
    %115 = vector.broadcast %cst_61 : f32 to vector<32x32xf32>
    %116 = arith.select %114, %115, %112 : vector<32x32xi1>, vector<32x32xf32>
    %c0_62 = arith.constant 0 : index
    %c2_63 = arith.constant 2 : index
    %c0_64 = arith.constant 0 : index
    %c0_65 = arith.constant 0 : index
    %117 = vector.load %arg10[%c0_62, %c2_63, %c0_64, %c0_65] : memref<1x4x32x32xf32, #tpu.memory_space<vmem>>, vector<1x1x32x32xf32>
    %118 = vector.shape_cast %117 : vector<1x1x32x32xf32> to vector<32x32xf32>
    %119 = vector.shape_cast %116 : vector<32x32xf32> to vector<1x1x32x32xf32>
    tpu.vector_store %arg10[%c0_62, %c2_63, %c0_64, %c0_65], %119 {strides = array<i32>} : memref<1x4x32x32xf32, #tpu.memory_space<vmem>>, vector<1x1x32x32xf32>,
    %120 = arith.truncf %116 : vector<32x32xf32> to vector<32x32xbf16>
    %121 = vector.extract_strided_slice %1 {offsets = [0, 16], sizes = [32, 8], strides = [1, 1]} : vector<32x32xbf16> to vector<32x8xbf16>
    %cst_66 = arith.constant dense<0.000000e+00> : vector<32x8xf32>
    %122 = tpu.matmul %120, %121, %cst_66 {dimension_numbers = #tpu.dot_dimension_numbers<[1], [0], [0], [1], [0, 0, 1, 1], [], []>} : vector<32x32xbf16>, vector<32x8xbf16>, vector<32x8xf32> -> vector<32x8xf32>
    %c0_67 = arith.constant 0 : index
    %c0_68 = arith.constant 0 : index
    %c16 = arith.constant 16 : index
    %123 = vector.load %arg9[%c0_67, %c0_68, %c16] : memref<1x32x32xf32, #tpu.memory_space<vmem>>, vector<1x32x8xf32>
    %124 = vector.shape_cast %123 : vector<1x32x8xf32> to vector<32x8xf32>
    %125 = vector.shape_cast %122 : vector<32x8xf32> to vector<1x32x8xf32>
    tpu.vector_store %arg9[%c0_67, %c0_68, %c16], %125 {strides = array<i32>} : memref<1x32x32xf32, #tpu.memory_space<vmem>>, vector<1x32x8xf32>,
    %126 = vector.extract_strided_slice %3 {offsets = [0, 3], sizes = [32, 1], strides = [1, 1]} : vector<32x4xf32> to vector<32x1xf32>
    %127 = vector.extract_strided_slice %5 {offsets = [3, 0], sizes = [1, 32], strides = [1, 1]} : vector<4x32xf32> to vector<1x32xf32>
    %128 = vector.broadcast %126 : vector<32x1xf32> to vector<32x32xf32>
    %129 = vector.broadcast %127 : vector<1x32xf32> to vector<32x32xf32>
    %130 = arith.addf %128, %129 : vector<32x32xf32>
    %c3 = arith.constant 3 : index
    %c0_69 = arith.constant 0 : index
    %c0_70 = arith.constant 0 : index
    %c0_71 = arith.constant 0 : index
    %131 = vector.load %arg2[%c3, %c0_69, %c0_70, %c0_71] : memref<4x1x32x32xf32, #tpu.memory_space<vmem>>, vector<1x1x32x32xf32>
    %132 = vector.shape_cast %131 : vector<1x1x32x32xf32> to vector<32x32xf32>
    %133 = arith.addf %130, %132 : vector<32x32xf32>
    %cst_72 = arith.constant 0.000000e+00 : f32
    %134 = vector.broadcast %cst_72 : f32 to vector<32x32xf32>
    %135 = arith.cmpf oge, %133, %134 : vector<32x32xf32>
    %cst_73 = arith.constant 2.000000e-01 : f32
    %136 = vector.broadcast %cst_73 : f32 to vector<32x32xf32>
    %137 = arith.mulf %136, %133 : vector<32x32xf32>
    %138 = arith.select %135, %133, %137 : vector<32x32xi1>, vector<32x32xf32>
    %c0_74 = arith.constant 0 : index
    %c3_75 = arith.constant 3 : index
    %c0_76 = arith.constant 0 : index
    %c0_77 = arith.constant 0 : index
    %139 = vector.load %arg5[%c0_74, %c3_75, %c0_76, %c0_77] : memref<1x4x32x32xbf16, #tpu.memory_space<vmem>>, vector<1x1x32x32xbf16>
    %140 = vector.shape_cast %139 : vector<1x1x32x32xbf16> to vector<32x32xbf16>
    %141 = arith.extf %140 : vector<32x32xbf16> to vector<32x32xf32>
    %142 = arith.addf %138, %141 : vector<32x32xf32>
    %cst_78 = arith.constant dense<0xFF800000> : vector<32xf32>
    %143 = vector.multi_reduction <maximumf>, %142, %cst_78 [1] : vector<32x32xf32> to vector<32xf32>
    %144 = vector.shape_cast %143 : vector<32xf32> to vector<32x1xf32>
    %145 = vector.broadcast %144 : vector<32x1xf32> to vector<32x32xf32>
    %146 = arith.subf %142, %145 : vector<32x32xf32>
    %147 = math.exp %146 : vector<32x32xf32>
    %cst_79 = arith.constant dense<0.000000e+00> : vector<32xf32>
    %148 = vector.multi_reduction <add>, %147, %cst_79 [1] : vector<32x32xf32> to vector<32xf32>
    %149 = vector.shape_cast %148 : vector<32xf32> to vector<32x1xf32>
    %150 = tpu.reciprocal %149 : vector<32x1xf32> -> vector<32x1xf32>
    %151 = vector.broadcast %150 : vector<32x1xf32> to vector<32x32xf32>
    %152 = arith.mulf %147, %151 : vector<32x32xf32>
    %cst_80 = arith.constant -5.000000e+11 : f32
    %153 = vector.broadcast %cst_80 : f32 to vector<32x32xf32>
    %154 = arith.cmpf olt, %142, %153 : vector<32x32xf32>
    %cst_81 = arith.constant 0.000000e+00 : f32
    %155 = vector.broadcast %cst_81 : f32 to vector<32x32xf32>
    %156 = arith.select %154, %155, %152 : vector<32x32xi1>, vector<32x32xf32>
    %c0_82 = arith.constant 0 : index
    %c3_83 = arith.constant 3 : index
    %c0_84 = arith.constant 0 : index
    %c0_85 = arith.constant 0 : index
    %157 = vector.load %arg10[%c0_82, %c3_83, %c0_84, %c0_85] : memref<1x4x32x32xf32, #tpu.memory_space<vmem>>, vector<1x1x32x32xf32>
    %158 = vector.shape_cast %157 : vector<1x1x32x32xf32> to vector<32x32xf32>
    %159 = vector.shape_cast %156 : vector<32x32xf32> to vector<1x1x32x32xf32>
    tpu.vector_store %arg10[%c0_82, %c3_83, %c0_84, %c0_85], %159 {strides = array<i32>} : memref<1x4x32x32xf32, #tpu.memory_space<vmem>>, vector<1x1x32x32xf32>,
    %160 = arith.truncf %156 : vector<32x32xf32> to vector<32x32xbf16>
    %161 = vector.extract_strided_slice %1 {offsets = [0, 24], sizes = [32, 8], strides = [1, 1]} : vector<32x32xbf16> to vector<32x8xbf16>
    %cst_86 = arith.constant dense<0.000000e+00> : vector<32x8xf32>
    %162 = tpu.matmul %160, %161, %cst_86 {dimension_numbers = #tpu.dot_dimension_numbers<[1], [0], [0], [1], [0, 0, 1, 1], [], []>} : vector<32x32xbf16>, vector<32x8xbf16>, vector<32x8xf32> -> vector<32x8xf32>
    %c0_87 = arith.constant 0 : index
    %c0_88 = arith.constant 0 : index
    %c24 = arith.constant 24 : index
    %163 = vector.load %arg9[%c0_87, %c0_88, %c24] : memref<1x32x32xf32, #tpu.memory_space<vmem>>, vector<1x32x8xf32>
    %164 = vector.shape_cast %163 : vector<1x32x8xf32> to vector<32x8xf32>
    %165 = vector.shape_cast %162 : vector<32x8xf32> to vector<1x32x8xf32>
    tpu.vector_store %arg9[%c0_87, %c0_88, %c24], %165 {strides = array<i32>} : memref<1x32x32xf32, #tpu.memory_space<vmem>>, vector<1x32x8xf32>,
    %c0_89 = arith.constant 0 : index
    %c0_90 = arith.constant 0 : index
    %c0_91 = arith.constant 0 : index
    %166 = vector.load %arg9[%c0_89, %c0_90, %c0_91] : memref<1x32x32xf32, #tpu.memory_space<vmem>>, vector<1x32x32xf32>
    %167 = vector.shape_cast %166 : vector<1x32x32xf32> to vector<32x32xf32>
    %c0_92 = arith.constant 0 : index
    %c0_93 = arith.constant 0 : index
    %c0_94 = arith.constant 0 : index
    %168 = vector.load %arg7[%c0_92, %c0_93, %c0_94] : memref<1x32x32xf32, #tpu.memory_space<vmem>>, vector<1x32x32xf32>
    %169 = vector.shape_cast %168 : vector<1x32x32xf32> to vector<32x32xf32>
    %170 = arith.addf %167, %169 : vector<32x32xf32>
    %c0_95 = arith.constant 0 : index
    %c0_96 = arith.constant 0 : index
    %171 = vector.load %arg8[%c0_95, %c0_96] : memref<1x32xf32, #tpu.memory_space<vmem>>, vector<1x32xf32>
    %172 = vector.broadcast %171 : vector<1x32xf32> to vector<32x32xf32>
    %173 = arith.addf %170, %172 : vector<32x32xf32>
    %c0_97 = arith.constant 0 : index
    %c0_98 = arith.constant 0 : index
    %c0_99 = arith.constant 0 : index
    %174 = vector.load %arg9[%c0_97, %c0_98, %c0_99] : memref<1x32x32xf32, #tpu.memory_space<vmem>>, vector<1x32x32xf32>
    %175 = vector.shape_cast %174 : vector<1x32x32xf32> to vector<32x32xf32>
    %176 = vector.shape_cast %173 : vector<32x32xf32> to vector<1x32x32xf32>
    tpu.vector_store %arg9[%c0_97, %c0_98, %c0_99], %176 {strides = array<i32>} : memref<1x32x32xf32, #tpu.memory_space<vmem>>, vector<1x32x32xf32>,
    return
  }
  func.func @transform_0(%arg0: i32, %arg1: i32) -> (i32, i32, i32, i32) {
    %c0_i32 = arith.constant 0 : i32
    %c0_i32_0 = arith.constant 0 : i32
    %c0_i32_1 = arith.constant 0 : i32
    return %c0_i32, %arg0, %arg1, %c0_i32_0 : i32, i32, i32, i32
  }
  func.func @transform_1(%arg0: i32, %arg1: i32) -> (i32, i32, i32) {
    %c0_i32 = arith.constant 0 : i32
    %c0_i32_0 = arith.constant 0 : i32
    return %arg0, %arg1, %c0_i32 : i32, i32, i32
  }
  func.func @transform_2(%arg0: i32, %arg1: i32) -> (i32, i32, i32) {
    %c0_i32 = arith.constant 0 : i32
    %c0_i32_0 = arith.constant 0 : i32
    %c0_i32_1 = arith.constant 0 : i32
    return %arg0, %c0_i32, %c0_i32_0 : i32, i32, i32
  }
  func.func @transform_3(%arg0: i32, %arg1: i32) -> (i32, i32, i32, i32) {
    %c0_i32 = arith.constant 0 : i32
    %c0_i32_0 = arith.constant 0 : i32
    %c0_i32_1 = arith.constant 0 : i32
    return %arg0, %c0_i32, %arg1, %c0_i32_0 : i32, i32, i32, i32
  }
  func.func @transform_4(%arg0: i32, %arg1: i32) -> (i32, i32, i32) {
    %c0_i32 = arith.constant 0 : i32
    %c0_i32_0 = arith.constant 0 : i32
    %c0_i32_1 = arith.constant 0 : i32
    return %arg0, %c0_i32, %c0_i32_0 : i32, i32, i32
  }
  func.func @transform_5(%arg0: i32, %arg1: i32) -> (i32, i32, i32) {
    %c0_i32 = arith.constant 0 : i32
    %c0_i32_0 = arith.constant 0 : i32
    return %arg0, %arg1, %c0_i32 : i32, i32, i32
  }
  func.func @transform_6(%arg0: i32, %arg1: i32) -> (i32, i32) {
    %c0_i32 = arith.constant 0 : i32
    %c0_i32_0 = arith.constant 0 : i32
    %c0_i32_1 = arith.constant 0 : i32
    return %c0_i32, %c0_i32_0 : i32, i32
  }
  func.func @transform_7(%arg0: i32, %arg1: i32) -> (i32, i32, i32) {
    %c0_i32 = arith.constant 0 : i32
    %c0_i32_0 = arith.constant 0 : i32
    return %arg0, %arg1, %c0_i32 : i32, i32, i32
  }
  func.func @transform_8(%arg0: i32, %arg1: i32) -> (i32, i32, i32, i32) {
    %c0_i32 = arith.constant 0 : i32
    %c0_i32_0 = arith.constant 0 : i32
    %c0_i32_1 = arith.constant 0 : i32
    return %arg0, %c0_i32, %arg1, %c0_i32_0 : i32, i32, i32, i32
  }
}

</mosaic_0001>

<llo_original>
// kernel: heterogeneous_gat.1
$region0: #{heterogeneous_gat.1}
  #allocation0 [shape = 'u32[]', space=smem, size = 0x4, offset = 0x4, fixed_abs, tag = 'smem constant byte address 0x4 - core index']
  #allocation1 [shape = 'u32[144,128]{1,0:T(1,128)}', space=vmem, size = 0x12000, scoped, tag = 'internal scratch']
  %s0 = inlined_call_operand.vmem [shape: f32[4,2,32,32], index: 0, kind: input, shape index: {}]
  %s1 = inlined_call_operand.vmem [shape: f32[2,32,4], index: 1, kind: input, shape index: {}]
  %s2 = inlined_call_operand.vmem [shape: f32[2,4,32], index: 2, kind: input, shape index: {}]
  %s3 = inlined_call_operand.vmem [shape: bf16[2,4,32,32], index: 3, kind: input, shape index: {}]
  %s4 = inlined_call_operand.vmem [shape: bf16[2,32,32], index: 4, kind: input, shape index: {}]
  %s5 = inlined_call_operand.vmem [shape: f32[2,32,32], index: 5, kind: input, shape index: {}]
  %s6 = inlined_call_operand.vmem [shape: f32[1,32], index: 6, kind: input, shape index: {}]
  %s7 = inlined_call_operand.vmem [shape: f32[2,32,32], index: 7, kind: output, shape index: {0}]
  %s8 = inlined_call_operand.vmem [shape: f32[2,4,32,32], index: 8, kind: output, shape index: {1}]
  %9 = xla_tuple %s7, %s8
  %s10 = sld [smem:[#allocation0]]
  $region107: #{heterogeneous_gat.1} parent=0
    _
  %s12 = ssub.s32 1, %s10
  %s13 = scalar_select 0, %s12, %s10
  $region1: #{heterogeneous_gat.1} parent=0
    #allocation2 [shape = 'u8[131072]{0}', space=vmem, size = 0x20000, scoped, tag = 'input window, operand 0']
    loop: start=0, step=1, limit=4
    $region2: #{heterogeneous_gat.1} parent=1 // loop_pre_header
      _
    $region3: #{heterogeneous_gat.1} parent=1 // loop_header
      %s15 = sphi 0, %s19
      %p16 = scmp.ge.s32.totalorder %s15, 4
      %s22 = sphi 0, %s34
      %s23 = sphi 0, %s30
      %s24 = sphi 0, %s22
      %s25 = sphi 0, %s23
      %s26 = sphi 0, %s24
      %s27 = sphi 0, %s25
      %s39 = sphi 0, %s41
      %s42 = sphi 0, %s39
      %s43 = sphi 0, %s42
      %s59 = sphi 0, %s43
      %s67 = sphi 0, %s69
      %s70 = sphi 0, %s67
      %s71 = sphi 0, %s70
      %s87 = sphi 0, %s71
      %s93 = sphi 0, %s95
      %s96 = sphi 0, %s93
      %s97 = sphi 0, %s96
      %s113 = sphi 0, %s97
      %s121 = sphi 0, %s123
      %s124 = sphi 0, %s121
      %s125 = sphi 0, %s124
      %s141 = sphi 0, %s125
      %s147 = sphi 0, %s149
      %s150 = sphi 0, %s147
      %s151 = sphi 0, %s150
      %s167 = sphi 0, %s151
      %s175 = sphi 0, %s177
      %s178 = sphi 0, %s175
      %s179 = sphi 0, %s178
      %s195 = sphi 0, %s179
      %s199 = sphi 0, %s199
      %s201 = sphi 0, %s199
      %s202 = sphi 0, %s201
      %s216 = sphi 0, %s202
      %s224 = sphi 0, %s226
      %s227 = sphi 0, %s224
      %s228 = sphi 0, %s227
      %s244 = sphi 0, %s228
      %s252 = sphi 0, %s254
      %s255 = sphi 0, %s252
      %s256 = sphi 0, %s255
      %s272 = sphi 0, %s256
    $region4: #{heterogeneous_gat.1} parent=1 // loop_header_branch
      %18 = sbr.rel (%p16) target = $region8
    $region5: #{heterogeneous_gat.1} parent=1 // loop_body
      %s20 = ssub.s32 %s15, 1
      %s21 = ssub.s32 %s15, 2
      %s28 = sadd.s32 1, %s23
      %p29 = scmp.ge.s32.totalorder %s28, 1
      %s30 = scalar_select %p29, 0, %s28
      %s31 = sadd.s32 1, %s22
      %s32 = scalar_select %p29, %s31, %s22
      %p33 = scmp.ge.s32.totalorder %s32, 2
      %s34 = scalar_select %p33, 0, %s32
      %s35 = ssub.s32 %s22, %s34
      %s36 = ssub.s32 %s23, %s30
      %s37 = sor.u32 %s35, %s36
      %p38 = scmp.eq.s32.totalorder %s37, 0
      %s40 = sadd.s32 %s39, 1
      %s41 = scalar_select %p38, %s39, %s40
      %p44 = pneg %p38
      %p45 = scmp.eq.s32.totalorder %s15, 1
      %p46 = por %p44, %p45
      %p47 = scmp.ne.s32.totalorder %s39, %s42
      %p48 = scmp.eq.s32.totalorder %s15, 0
      %p49 = por %p47, %p48
      %p50 = scmp.ne.s32.totalorder %s39, %s42
      %p51 = scmp.eq.s32.totalorder %s20, 1
      %p52 = por %p50, %p51
      %p53 = scmp.ne.s32.totalorder %s42, %s43
      %p54 = scmp.eq.s32.totalorder %s20, 0
      %p55 = por %p53, %p54
      %p56 = scmp.ne.s32.totalorder %s42, %s43
      %p57 = scmp.eq.s32.totalorder %s21, 1
      %p58 = por %p56, %p57
      %p60 = scmp.ne.s32.totalorder %s43, %s59
      %p61 = scmp.eq.s32.totalorder %s21, 0
      %p62 = por %p60, %p61
      %s63 = ssub.s32 %s22, %s34
      %s64 = ssub.s32 %s23, %s30
      %s65 = sor.u32 %s63, %s64
      %p66 = scmp.eq.s32.totalorder %s65, 0
      %s68 = sadd.s32 %s67, 1
      %s69 = scalar_select %p66, %s67, %s68
      %p72 = pneg %p66
      %p73 = scmp.eq.s32.totalorder %s15, 1
      %p74 = por %p72, %p73
      %p75 = scmp.ne.s32.totalorder %s67, %s70
      %p76 = scmp.eq.s32.totalorder %s15, 0
      %p77 = por %p75, %p76
      %p78 = scmp.ne.s32.totalorder %s67, %s70
      %p79 = scmp.eq.s32.totalorder %s20, 1
      %p80 = por %p78, %p79
      %p81 = scmp.ne.s32.totalorder %s70, %s71
      %p82 = scmp.eq.s32.totalorder %s20, 0
      %p83 = por %p81, %p82
      %p84 = scmp.ne.s32.totalorder %s70, %s71
      %p85 = scmp.eq.s32.totalorder %s21, 1
      %p86 = por %p84, %p85
      %p88 = scmp.ne.s32.totalorder %s71, %s87
      %p89 = scmp.eq.s32.totalorder %s21, 0
      %p90 = por %p88, %p89
      %s91 = ssub.s32 %s22, %s34
      %p92 = scmp.eq.s32.totalorder %s91, 0
      %s94 = sadd.s32 %s93, 1
      %s95 = scalar_select %p92, %s93, %s94
      %p98 = pneg %p92
      %p99 = scmp.eq.s32.totalorder %s15, 1
      %p100 = por %p98, %p99
      %p101 = scmp.ne.s32.totalorder %s93, %s96
      %p102 = scmp.eq.s32.totalorder %s15, 0
      %p103 = por %p101, %p102
      %p104 = scmp.ne.s32.totalorder %s93, %s96
      %p105 = scmp.eq.s32.totalorder %s20, 1
      %p106 = por %p104, %p105
      %p107 = scmp.ne.s32.totalorder %s96, %s97
      %p108 = scmp.eq.s32.totalorder %s20, 0
      %p109 = por %p107, %p108
      %p110 = scmp.ne.s32.totalorder %s96, %s97
      %p111 = scmp.eq.s32.totalorder %s21, 1
      %p112 = por %p110, %p111
      %p114 = scmp.ne.s32.totalorder %s97, %s113
      %p115 = scmp.eq.s32.totalorder %s21, 0
      %p116 = por %p114, %p115
      %s117 = ssub.s32 %s22, %s34
      %s118 = ssub.s32 %s23, %s30
      %s119 = sor.u32 %s117, %s118
      %p120 = scmp.eq.s32.totalorder %s119, 0
      %s122 = sadd.s32 %s121, 1
      %s123 = scalar_select %p120, %s121, %s122
      %p126 = pneg %p120
      %p127 = scmp.eq.s32.totalorder %s15, 1
      %p128 = por %p126, %p127
      %p129 = scmp.ne.s32.totalorder %s121, %s124
      %p130 = scmp.eq.s32.totalorder %s15, 0
      %p131 = por %p129, %p130
      %p132 = scmp.ne.s32.totalorder %s121, %s124
      %p133 = scmp.eq.s32.totalorder %s20, 1
      %p134 = por %p132, %p133
      %p135 = scmp.ne.s32.totalorder %s124, %s125
      %p136 = scmp.eq.s32.totalorder %s20, 0
      %p137 = por %p135, %p136
      %p138 = scmp.ne.s32.totalorder %s124, %s125
      %p139 = scmp.eq.s32.totalorder %s21, 1
      %p140 = por %p138, %p139
      %p142 = scmp.ne.s32.totalorder %s125, %s141
      %p143 = scmp.eq.s32.totalorder %s21, 0
      %p144 = por %p142, %p143
      %s145 = ssub.s32 %s22, %s34
      %p146 = scmp.eq.s32.totalorder %s145, 0
      %s148 = sadd.s32 %s147, 1
      %s149 = scalar_select %p146, %s147, %s148
      %p152 = pneg %p146
      %p153 = scmp.eq.s32.totalorder %s15, 1
      %p154 = por %p152, %p153
      %p155 = scmp.ne.s32.totalorder %s147, %s150
      %p156 = scmp.eq.s32.totalorder %s15, 0
      %p157 = por %p155, %p156
      %p158 = scmp.ne.s32.totalorder %s147, %s150
      %p159 = scmp.eq.s32.totalorder %s20, 1
      %p160 = por %p158, %p159
      %p161 = scmp.ne.s32.totalorder %s150, %s151
      %p162 = scmp.eq.s32.totalorder %s20, 0
      %p163 = por %p161, %p162
      %p164 = scmp.ne.s32.totalorder %s150, %s151
      %p165 = scmp.eq.s32.totalorder %s21, 1
      %p166 = por %p164, %p165
      %p168 = scmp.ne.s32.totalorder %s151, %s167
      %p169 = scmp.eq.s32.totalorder %s21, 0
      %p170 = por %p168, %p169
      %s171 = ssub.s32 %s22, %s34
      %s172 = ssub.s32 %s23, %s30
      %s173 = sor.u32 %s171, %s172
      %p174 = scmp.eq.s32.totalorder %s173, 0
      %s176 = sadd.s32 %s175, 1
      %s177 = scalar_select %p174, %s175, %s176
      %p180 = pneg %p174
      %p181 = scmp.eq.s32.totalorder %s15, 1
      %p182 = por %p180, %p181
      %p183 = scmp.ne.s32.totalorder %s175, %s178
      %p184 = scmp.eq.s32.totalorder %s15, 0
      %p185 = por %p183, %p184
      %p186 = scmp.ne.s32.totalorder %s175, %s178
      %p187 = scmp.eq.s32.totalorder %s20, 1
      %p188 = por %p186, %p187
      %p189 = scmp.ne.s32.totalorder %s178, %s179
      %p190 = scmp.eq.s32.totalorder %s20, 0
      %p191 = por %p189, %p190
      %p192 = scmp.ne.s32.totalorder %s178, %s179
      %p193 = scmp.eq.s32.totalorder %s21, 1
      %p194 = por %p192, %p193
      %p196 = scmp.ne.s32.totalorder %s179, %s195
      %p197 = scmp.eq.s32.totalorder %s21, 0
      %p198 = por %p196, %p197
      %s200 = sadd.s32 %s199, 1
      %p203 = scmp.eq.s32.totalorder %s15, 1
      %p204 = scmp.ne.s32.totalorder %s199, %s201
      %p205 = scmp.eq.s32.totalorder %s15, 0
      %p206 = por %p204, %p205
      %p207 = scmp.ne.s32.totalorder %s199, %s201
      %p208 = scmp.eq.s32.totalorder %s20, 1
      %p209 = por %p207, %p208
      %p210 = scmp.ne.s32.totalorder %s201, %s202
      %p211 = scmp.eq.s32.totalorder %s20, 0
      %p212 = por %p210, %p211
      %p213 = scmp.ne.s32.totalorder %s201, %s202
      %p214 = scmp.eq.s32.totalorder %s21, 1
      %p215 = por %p213, %p214
      %p217 = scmp.ne.s32.totalorder %s202, %s216
      %p218 = scmp.eq.s32.totalorder %s21, 0
      %p219 = por %p217, %p218
      %s220 = ssub.s32 %s22, %s34
      %s221 = ssub.s32 %s23, %s30
      %s222 = sor.u32 %s220, %s221
      %p223 = scmp.eq.s32.totalorder %s222, 0
      %s225 = sadd.s32 %s224, 1
      %s226 = scalar_select %p223, %s224, %s225
      %p229 = pneg %p223
      %p230 = scmp.eq.s32.totalorder %s15, 1
      %p231 = por %p229, %p230
      %p232 = scmp.ne.s32.totalorder %s224, %s227
      %p233 = scmp.eq.s32.totalorder %s15, 0
      %p234 = por %p232, %p233
      %p235 = scmp.ne.s32.totalorder %s224, %s227
      %p236 = scmp.eq.s32.totalorder %s20, 1
      %p237 = por %p235, %p236
      %p238 = scmp.ne.s32.totalorder %s227, %s228
      %p239 = scmp.eq.s32.totalorder %s20, 0
      %p240 = por %p238, %p239
      %p241 = scmp.ne.s32.totalorder %s227, %s228
      %p242 = scmp.eq.s32.totalorder %s21, 1
      %p243 = por %p241, %p242
      %p245 = scmp.ne.s32.totalorder %s228, %s244
      %p246 = scmp.eq.s32.totalorder %s21, 0
      %p247 = por %p245, %p246
      %s248 = ssub.s32 %s22, %s34
      %s249 = ssub.s32 %s23, %s30
      %s250 = sor.u32 %s248, %s249
      %p251 = scmp.eq.s32.totalorder %s250, 0
      %s253 = sadd.s32 %s252, 1
      %s254 = scalar_select %p251, %s252, %s253
      %p257 = pneg %p251
      %p258 = scmp.eq.s32.totalorder %s15, 1
      %p259 = por %p257, %p258
      %p260 = scmp.ne.s32.totalorder %s252, %s255
      %p261 = scmp.eq.s32.totalorder %s15, 0
      %p262 = por %p260, %p261
      %p263 = scmp.ne.s32.totalorder %s252, %s255
      %p264 = scmp.eq.s32.totalorder %s20, 1
      %p265 = por %p263, %p264
      %p266 = scmp.ne.s32.totalorder %s255, %s256
      %p267 = scmp.eq.s32.totalorder %s20, 0
      %p268 = por %p266, %p267
      %p269 = scmp.ne.s32.totalorder %s255, %s256
      %p270 = scmp.eq.s32.totalorder %s21, 1
      %p271 = por %p269, %p270
      %p273 = scmp.ne.s32.totalorder %s256, %s272
      %p274 = scmp.eq.s32.totalorder %s21, 0
      %p275 = por %p273, %p274
      %p276 = scmp.le.s32.totalorder 1, %s15
      %p277 = scmp.lt.s32.totalorder %s15, 3
      %p278 = pnand %p276, %p277
      %p279 = pneg %p278
      // Predicated region
      $region9: #{heterogeneous_gat.1} parent=5 // pred_check
        _
      $region10: #{heterogeneous_gat.1} parent=5 // pred_check_branch
        %281 = sbr.rel (%p278) target = $region12
      $region11: #{heterogeneous_gat.1} parent=5 // pred_region
        %s282 = ssub.s32 %s15, 1
        // Predicated region
        $region13: #{heterogeneous_gat.1} parent=11 // pred_check
          %p283 = pneg %p212
        $region14: #{heterogeneous_gat.1} parent=11 // pred_check_branch
          %285 = sbr.rel (%p283) target = $region16
        $region15: #{heterogeneous_gat.1} parent=11 // pred_region
          _
        $region16: #{heterogeneous_gat.1} parent=11 // pred_fallthru
          _
      $region12: #{heterogeneous_gat.1} parent=5 // pred_fallthru
        _
      %p286 = scmp.lt.s32.totalorder %s15, 2
      // Predicated region
      $region17: #{heterogeneous_gat.1} parent=5 // pred_check
        %p287 = pneg %p286
      $region18: #{heterogeneous_gat.1} parent=5 // pred_check_branch
        %289 = sbr.rel (%p287) target = $region20
      $region19: #{heterogeneous_gat.1} parent=5 // pred_region
        // Predicated region
        $region21: #{heterogeneous_gat.1} parent=19 // pred_check
          %p290 = pneg %p49
        $region22: #{heterogeneous_gat.1} parent=19 // pred_check_branch
          %292 = sbr.rel (%p290) target = $region24
        $region23: #{heterogeneous_gat.1} parent=19 // pred_region
          %s293 = sand.u32 %s39, 1
          %s294 = sand.u32 %s39, 1
          %s295 = smul.addr %s294, 128
          %s296 = scalar_lea.vmem [#allocation2], %s295
          %s297 = smul.u32 4, %s23
          %s298 = smul.addr %s22, 4
          %s299 = sadd.s32 %s297, %s298
          %s300 = smul.addr %s299, 8
          %s301 = scalar_lea.vmem %s0, %s300
          // Predicated region
          $region25: #{heterogeneous_gat.1} parent=23 // pred_check
            _
          $region26: #{heterogeneous_gat.1} parent=23 // pred_check_branch
            %303 = sbr.rel (0) target = $region28
          $region27: #{heterogeneous_gat.1} parent=23 // pred_region
            // Predicated region
            $region29: #{heterogeneous_gat.1} parent=27 // pred_check
              _
            $region30: #{heterogeneous_gat.1} parent=27 // pred_check_branch
              %305 = sbr.rel (0) target = $region32
            $region31: #{heterogeneous_gat.1} parent=27 // pred_region
              // Predicated region
              $region44: #{heterogeneous_gat.1} parent=31 // pred_check
                _
              $region45: #{heterogeneous_gat.1} parent=31 // pred_check_branch
                %350 = sbr.rel (0) target = $region47
              $region46: #{heterogeneous_gat.1} parent=31 // pred_region
                loop: start=0, step=1, limit=1
                $region48: #{heterogeneous_gat.1} parent=46 // loop_pre_header
                  _
                $region49: #{heterogeneous_gat.1} parent=46 // loop_header
                  %s352 = sphi 0, %s356
                  %p353 = scmp.ge.s32.totalorder %s352, 1
                  %s357 = sphi %s301, %s301
                  %s358 = sphi %s296, %s296
                $region50: #{heterogeneous_gat.1} parent=46 // loop_header_branch
                  %355 = sbr.rel (%p353) target = $region54
                $region51: #{heterogeneous_gat.1} parent=46 // loop_body
                  %v359 = vld [vmem:[%s357] sm:$0xff]
                  %360 = vst [vmem:[%s358] sm:$0xff] %v359
                  %v361 = vld [vmem:[%s357 + $0x8] sm:$0xff]
                  %362 = vst [vmem:[%s358 + $0x8] sm:$0xff] %v361
                  %v363 = vld [vmem:[%s357 + $0x10] sm:$0xff]
                  %364 = vst [vmem:[%s358 + $0x10] sm:$0xff] %v363
                  %v365 = vld [vmem:[%s357 + $0x18] sm:$0xff]
                  %366 = vst [vmem:[%s358 + $0x18] sm:$0xff] %v365
                  %v367 = vld [vmem:[%s357 + $0x40] sm:$0xff]
                  %368 = vst [vmem:[%s358 + $0x20] sm:$0xff] %v367
                  %v369 = vld [vmem:[%s357 + $0x48] sm:$0xff]
                  %370 = vst [vmem:[%s358 + $0x28] sm:$0xff] %v369
                  %v371 = vld [vmem:[%s357 + $0x50] sm:$0xff]
                  %372 = vst [vmem:[%s358 + $0x30] sm:$0xff] %v371
                  %v373 = vld [vmem:[%s357 + $0x58] sm:$0xff]
                  %374 = vst [vmem:[%s358 + $0x38] sm:$0xff] %v373
                  %v375 = vld [vmem:[%s357 + $0x80] sm:$0xff]
                  %376 = vst [vmem:[%s358 + $0x40] sm:$0xff] %v375
                  %v377 = vld [vmem:[%s357 + $0x88] sm:$0xff]
                  %378 = vst [vmem:[%s358 + $0x48] sm:$0xff] %v377
                  %v379 = vld [vmem:[%s357 + $0x90] sm:$0xff]
                  %380 = vst [vmem:[%s358 + $0x50] sm:$0xff] %v379
                  %v381 = vld [vmem:[%s357 + $0x98] sm:$0xff]
                  %382 = vst [vmem:[%s358 + $0x58] sm:$0xff] %v381
                  %v383 = vld [vmem:[%s357 + $0xc0] sm:$0xff]
                  %384 = vst [vmem:[%s358 + $0x60] sm:$0xff] %v383
                  %v385 = vld [vmem:[%s357 + $0xc8] sm:$0xff]
                  %386 = vst [vmem:[%s358 + $0x68] sm:$0xff] %v385
                  %v387 = vld [vmem:[%s357 + $0xd0] sm:$0xff]
                  %388 = vst [vmem:[%s358 + $0x70] sm:$0xff] %v387
                  %v389 = vld [vmem:[%s357 + $0xd8] sm:$0xff]
                  %390 = vst [vmem:[%s358 + $0x78] sm:$0xff] %v389
                $region52: #{heterogeneous_gat.1} parent=46 // loop_footer
                  %s356 = sadd.s32 1, %s352
                $region53: #{heterogeneous_gat.1} parent=46 // loop_footer_branch
                  %351 = sbr.rel target = $region49
                $region54: #{heterogeneous_gat.1} parent=46 // loop_exit
                  _
              $region47: #{heterogeneous_gat.1} parent=31 // pred_fallthru
                _
              // Predicated region
              $region55: #{heterogeneous_gat.1} parent=31 // pred_check
                _
              $region56: #{heterogeneous_gat.1} parent=31 // pred_check_branch
                %392 = sbr.rel target = $region58
              $region57: #{heterogeneous_gat.1} parent=31 // pred_region
                _
              $region58: #{heterogeneous_gat.1} parent=31 // pred_fallthru
                _
            $region32: #{heterogeneous_gat.1} parent=27 // pred_fallthru
              _
            // Predicated region
            $region33: #{heterogeneous_gat.1} parent=27 // pred_check
              _
            $region34: #{heterogeneous_gat.1} parent=27 // pred_check_branch
              %307 = sbr.rel target = $region36
            $region35: #{heterogeneous_gat.1} parent=27 // pred_region
              loop: start=0, step=1, limit=1
              $region37: #{heterogeneous_gat.1} parent=35 // loop_pre_header
                _
              $region38: #{heterogeneous_gat.1} parent=35 // loop_header
                %s310 = sphi 0, %s314
                %p311 = scmp.ge.s32.totalorder %s310, 1
                %s315 = sphi %s301, %s301
                %s316 = sphi %s296, %s296
              $region39: #{heterogeneous_gat.1} parent=35 // loop_header_branch
                %313 = sbr.rel (%p311) target = $region43
              $region40: #{heterogeneous_gat.1} parent=35 // loop_body
                %v317 = vld [vmem:[%s315] sm:$0xff]
                %318 = vst [vmem:[%s316] sm:$0xff] %v317
                %v319 = vld [vmem:[%s315 + $0x8] sm:$0xff]
                %320 = vst [vmem:[%s316 + $0x8] sm:$0xff] %v319
                %v321 = vld [vmem:[%s315 + $0x10] sm:$0xff]
                %322 = vst [vmem:[%s316 + $0x10] sm:$0xff] %v321
                %v323 = vld [vmem:[%s315 + $0x18] sm:$0xff]
                %324 = vst [vmem:[%s316 + $0x18] sm:$0xff] %v323
                %v325 = vld [vmem:[%s315 + $0x40] sm:$0xff]
                %326 = vst [vmem:[%s316 + $0x20] sm:$0xff] %v325
                %v327 = vld [vmem:[%s315 + $0x48] sm:$0xff]
                %328 = vst [vmem:[%s316 + $0x28] sm:$0xff] %v327
                %v329 = vld [vmem:[%s315 + $0x50] sm:$0xff]
                %330 = vst [vmem:[%s316 + $0x30] sm:$0xff] %v329
                %v331 = vld [vmem:[%s315 + $0x58] sm:$0xff]
                %332 = vst [vmem:[%s316 + $0x38] sm:$0xff] %v331
                %v333 = vld [vmem:[%s315 + $0x80] sm:$0xff]
                %334 = vst [vmem:[%s316 + $0x40] sm:$0xff] %v333
                %v335 = vld [vmem:[%s315 + $0x88] sm:$0xff]
                %336 = vst [vmem:[%s316 + $0x48] sm:$0xff] %v335
                %v337 = vld [vmem:[%s315 + $0x90] sm:$0xff]
                %338 = vst [vmem:[%s316 + $0x50] sm:$0xff] %v337
                %v339 = vld [vmem:[%s315 + $0x98] sm:$0xff]
                %340 = vst [vmem:[%s316 + $0x58] sm:$0xff] %v339
                %v341 = vld [vmem:[%s315 + $0xc0] sm:$0xff]
                %342 = vst [vmem:[%s316 + $0x60] sm:$0xff] %v341
                %v343 = vld [vmem:[%s315 + $0xc8] sm:$0xff]
                %344 = vst [vmem:[%s316 + $0x68] sm:$0xff] %v343
                %v345 = vld [vmem:[%s315 + $0xd0] sm:$0xff]
                %346 = vst [vmem:[%s316 + $0x70] sm:$0xff] %v345
                %v347 = vld [vmem:[%s315 + $0xd8] sm:$0xff]
                %348 = vst [vmem:[%s316 + $0x78] sm:$0xff] %v347
              $region41: #{heterogeneous_gat.1} parent=35 // loop_footer
                %s314 = sadd.s32 1, %s310
              $region42: #{heterogeneous_gat.1} parent=35 // loop_footer_branch
                %309 = sbr.rel target = $region38
              $region43: #{heterogeneous_gat.1} parent=35 // loop_exit
                _
            $region36: #{heterogeneous_gat.1} parent=27 // pred_fallthru
              _
          $region28: #{heterogeneous_gat.1} parent=23 // pred_fallthru
            _
          %393 = vnop
        $region24: #{heterogeneous_gat.1} parent=19 // pred_fallthru
          _
        // Predicated region
        $region59: #{heterogeneous_gat.1} parent=19 // pred_check
          %p394 = pneg %p77
        $region60: #{heterogeneous_gat.1} parent=19 // pred_check_branch
          %396 = sbr.rel (%p394) target = $region62
        $region61: #{heterogeneous_gat.1} parent=19 // pred_region
          %s397 = smul.u32 4, %s23
          %p398 = scmp.lt.s32.totalorder %s22, 1
          %s399 = scalar_select %p398, %s22, 1
          %p400 = scmp.lt.s32.totalorder %s397, 3
          %s401 = scalar_select %p400, %s397, 3
          %s402 = smul.addr %s399, 4
          %s403 = sadd.s32 %s401, %s402
          %s404 = smul.addr %s403, 8
          %s405 = scalar_lea.vmem %s1, %s404
          %s406 = smul.u32 4, %s23
        $region62: #{heterogeneous_gat.1} parent=19 // pred_fallthru
          _
        // Predicated region
        $region63: #{heterogeneous_gat.1} parent=19 // pred_check
          %p407 = pneg %p103
        $region64: #{heterogeneous_gat.1} parent=19 // pred_check_branch
          %409 = sbr.rel (%p407) target = $region66
        $region65: #{heterogeneous_gat.1} parent=19 // pred_region
          %p410 = scmp.lt.s32.totalorder %s22, 1
          %s411 = scalar_select %p410, %s22, 1
          %s412 = smul.addr %s411, 4
          %s413 = scalar_lea.vmem %s2, %s412
        $region66: #{heterogeneous_gat.1} parent=19 // pred_fallthru
          _
        // Predicated region
        $region67: #{heterogeneous_gat.1} parent=19 // pred_check
          %p414 = pneg %p131
        $region68: #{heterogeneous_gat.1} parent=19 // pred_check_branch
          %416 = sbr.rel (%p414) target = $region70
        $region69: #{heterogeneous_gat.1} parent=19 // pred_region
          %s417 = smul.u32 4, %s23
          %p418 = scmp.lt.s32.totalorder %s22, 1
          %s419 = scalar_select %p418, %s22, 1
          %p420 = scmp.lt.s32.totalorder %s417, 3
          %s421 = scalar_select %p420, %s417, 3
          %s422 = smul.addr %s419, 16
          %s423 = sadd.s32 %s421, %s422
          %s424 = smul.addr %s423, 4
          %s425 = scalar_lea.vmem %s3, %s424
          %s426 = smul.u32 4, %s23
        $region70: #{heterogeneous_gat.1} parent=19 // pred_fallthru
          _
        // Predicated region
        $region71: #{heterogeneous_gat.1} parent=19 // pred_check
          %p427 = pneg %p157
        $region72: #{heterogeneous_gat.1} parent=19 // pred_check_branch
          %429 = sbr.rel (%p427) target = $region74
        $region73: #{heterogeneous_gat.1} parent=19 // pred_region
          %p430 = scmp.lt.s32.totalorder %s22, 1
          %s431 = scalar_select %p430, %s22, 1
          %s432 = smul.addr %s431, 4
          %s433 = smul.addr %s432, 4
          %s434 = scalar_lea.vmem %s4, %s433
        $region74: #{heterogeneous_gat.1} parent=19 // pred_fallthru
          _
        // Predicated region
        $region75: #{heterogeneous_gat.1} parent=19 // pred_check
          %p435 = pneg %p185
        $region76: #{heterogeneous_gat.1} parent=19 // pred_check_branch
          %437 = sbr.rel (%p435) target = $region78
        $region77: #{heterogeneous_gat.1} parent=19 // pred_region
          %s438 = smul.u32 4, %s23
          %p439 = scmp.lt.s32.totalorder %s22, 1
          %s440 = scalar_select %p439, %s22, 1
          %p441 = scmp.lt.s32.totalorder %s438, 3
          %s442 = scalar_select %p441, %s438, 3
          %s443 = smul.addr %s440, 4
          %s444 = sadd.s32 %s442, %s443
          %s445 = smul.addr %s444, 8
          %s446 = scalar_lea.vmem %s5, %s445
          %s447 = smul.u32 4, %s23
        $region78: #{heterogeneous_gat.1} parent=19 // pred_fallthru
          _
      $region20: #{heterogeneous_gat.1} parent=5 // pred_fallthru
        _
      %p448 = scmp.le.s32.totalorder 1, %s15
      %p449 = scmp.lt.s32.totalorder %s15, 3
      %p450 = pnand %p448, %p449
      %p451 = pneg %p450
      // Predicated region
      $region79: #{heterogeneous_gat.1} parent=5 // pred_check
        _
      $region80: #{heterogeneous_gat.1} parent=5 // pred_check_branch
        %453 = sbr.rel (%p450) target = $region82
      $region81: #{heterogeneous_gat.1} parent=5 // pred_region
        %s454 = ssub.s32 %s15, 1
        %s455 = sand.u32 %s42, 1
        %s456 = sand.u32 %s42, 1
        %s457 = smul.addr %s456, 128
        %s458 = scalar_lea.vmem [#allocation2], %s457
        // Predicated region
        $region83: #{heterogeneous_gat.1} parent=81 // pred_check
          %p459 = pneg %p55
        $region84: #{heterogeneous_gat.1} parent=81 // pred_check_branch
          %461 = sbr.rel (%p459) target = $region86
        $region85: #{heterogeneous_gat.1} parent=81 // pred_region
          _
        $region86: #{heterogeneous_gat.1} parent=81 // pred_fallthru
          _
        %s462 = sand.u32 %s42, 1
        %s463 = sand.u32 %s42, 1
        %s464 = smul.addr %s463, 128
        %s465 = scalar_lea.vmem [#allocation2], %s464
        %p466 = pneg %p55
        %p467 = pneg %p52
        %s468 = smul.u32 4, %s25
        %p469 = scmp.lt.s32.totalorder %s24, 1
        %s470 = scalar_select %p469, %s24, 1
        %p471 = scmp.lt.s32.totalorder %s468, 3
        %s472 = scalar_select %p471, %s468, 3
        %s473 = smul.addr %s470, 4
        %s474 = sadd.s32 %s472, %s473
        %s475 = smul.addr %s474, 8
        %s476 = scalar_lea.vmem %s1, %s475
        %p477 = pneg %p83
        %p478 = pneg %p80
        %p479 = scmp.lt.s32.totalorder %s24, 1
        %s480 = scalar_select %p479, %s24, 1
        %s481 = smul.addr %s480, 4
        %s482 = scalar_lea.vmem %s2, %s481
        %p483 = pneg %p109
        %p484 = pneg %p106
        %s485 = smul.u32 4, %s25
        %p486 = scmp.lt.s32.totalorder %s24, 1
        %s487 = scalar_select %p486, %s24, 1
        %p488 = scmp.lt.s32.totalorder %s485, 3
        %s489 = scalar_select %p488, %s485, 3
        %s490 = smul.addr %s487, 16
        %s491 = sadd.s32 %s489, %s490
        %s492 = smul.addr %s491, 4
        %s493 = scalar_lea.vmem %s3, %s492
        %p494 = pneg %p137
        %p495 = pneg %p134
        %p496 = scmp.lt.s32.totalorder %s24, 1
        %s497 = scalar_select %p496, %s24, 1
        %s498 = smul.addr %s497, 4
        %s499 = smul.addr %s498, 4
        %s500 = scalar_lea.vmem %s4, %s499
        %p501 = pneg %p163
        %p502 = pneg %p160
        %s503 = smul.u32 4, %s25
        %p504 = scmp.lt.s32.totalorder %s24, 1
        %s505 = scalar_select %p504, %s24, 1
        %p506 = scmp.lt.s32.totalorder %s503, 3
        %s507 = scalar_select %p506, %s503, 3
        %s508 = smul.addr %s505, 4
        %s509 = sadd.s32 %s507, %s508
        %s510 = smul.addr %s509, 8
        %s511 = scalar_lea.vmem %s5, %s510
        %p512 = pneg %p191
        %p513 = pneg %p188
        %p514 = pneg %p212
        %p515 = pneg %p209
        %p516 = pneg %p240
        %p517 = pneg %p237
        %s518 = smul.u32 4, %s25
        %p519 = scmp.lt.s32.totalorder %s24, 1
        %s520 = scalar_select %p519, %s24, 1
        %p521 = scmp.lt.s32.totalorder %s518, 3
        %s522 = scalar_select %p521, %s518, 3
        %s523 = smul.addr %s520, 4
        %s524 = sadd.s32 %s522, %s523
        %s525 = smul.addr %s524, 8
        %s526 = scalar_lea.vmem %s7, %s525
        %p527 = pneg %p268
        %p528 = pneg %p265
        %s529 = smul.u32 4, %s25
        %p530 = scmp.lt.s32.totalorder %s24, 1
        %s531 = scalar_select %p530, %s24, 1
        %p532 = scmp.lt.s32.totalorder %s529, 3
        %s533 = scalar_select %p532, %s529, 3
        %s534 = smul.addr %s531, 16
        %s535 = sadd.s32 %s533, %s534
        %s536 = smul.addr %s535, 8
        %s537 = scalar_lea.vmem %s8, %s536
        %s538 = smul.u32 4, %s25
        %s539 = smul.u32 4, %s25
        %p540 = scmp.lt.s32.totalorder %s24, 1
        %s541 = scalar_select %p540, %s24, 1
        %p542 = scmp.lt.s32.totalorder %s539, 3
        %s543 = scalar_select %p542, %s539, 3
        %s544 = smul.addr %s541, 4
        %s545 = sadd.s32 %s543, %s544
        %s546 = smul.addr %s545, 8
        %s547 = scalar_lea.vmem %s1, %s546
        %s548 = smul.u32 4, %s25
        %p549 = scmp.lt.s32.totalorder %s24, 1
        %s550 = scalar_select %p549, %s24, 1
        %s551 = smul.addr %s550, 4
        %s552 = scalar_lea.vmem %s2, %s551
        %s553 = smul.u32 4, %s25
        %p554 = scmp.lt.s32.totalorder %s24, 1
        %s555 = scalar_select %p554, %s24, 1
        %p556 = scmp.lt.s32.totalorder %s553, 3
        %s557 = scalar_select %p556, %s553, 3
        %s558 = smul.addr %s555, 16
        %s559 = sadd.s32 %s557, %s558
        %s560 = smul.addr %s559, 4
        %s561 = scalar_lea.vmem %s3, %s560
        %s562 = smul.u32 4, %s25
        %p563 = scmp.lt.s32.totalorder %s24, 1
        %s564 = scalar_select %p563, %s24, 1
        %s565 = smul.addr %s564, 4
        %s566 = smul.addr %s565, 4
        %s567 = scalar_lea.vmem %s4, %s566
        %s568 = smul.u32 4, %s25
        %p569 = scmp.lt.s32.totalorder %s24, 1
        %s570 = scalar_select %p569, %s24, 1
        %p571 = scmp.lt.s32.totalorder %s568, 3
        %s572 = scalar_select %p571, %s568, 3
        %s573 = smul.addr %s570, 4
        %s574 = sadd.s32 %s572, %s573
        %s575 = smul.addr %s574, 8
        %s576 = scalar_lea.vmem %s5, %s575
        %s577 = smul.u32 4, %s25
        %s578 = smul.u32 4, %s25
        %p579 = scmp.lt.s32.totalorder %s24, 1
        %s580 = scalar_select %p579, %s24, 1
        %p581 = scmp.lt.s32.totalorder %s578, 3
        %s582 = scalar_select %p581, %s578, 3
        %s583 = smul.addr %s580, 4
        %s584 = sadd.s32 %s582, %s583
        %s585 = smul.addr %s584, 8
        %s586 = scalar_lea.vmem %s7, %s585
        %s587 = smul.u32 4, %s25
        %s588 = smul.u32 4, %s25
        %p589 = scmp.lt.s32.totalorder %s24, 1
        %s590 = scalar_select %p589, %s24, 1
        %p591 = scmp.lt.s32.totalorder %s588, 3
        %s592 = scalar_select %p591, %s588, 3
        %s593 = smul.addr %s590, 16
        %s594 = sadd.s32 %s592, %s593
        %s595 = smul.addr %s594, 8
        %s596 = scalar_lea.vmem %s8, %s595
        %s597 = smul.u32 4, %s25
        %v599 = vld [vmem:[%s567] sm:$0xf]
        %v600 = vld [vmem:[%s567 + $0x4] sm:$0xf]
        %v601 = vld [vmem:[%s567 + $0x8] sm:$0xf]
        %v602 = vld [vmem:[%s567 + $0xc] sm:$0xf]
        %v603 = vld [vmem:[%s547] sm:$0xff]
        %v604 = vld [vmem:[%s547 + $0x8] sm:$0xff]
        %v605 = vld [vmem:[%s547 + $0x10] sm:$0xff]
        %v606 = vld [vmem:[%s547 + $0x18] sm:$0xff]
        %v607 = vld [vmem:[%s552] sm:$0xf]
        %609 = vset.pattern.permute.xlu0 0
        %610 = vperm.xlu0 %609, %v603
        %v611 = vpop.permute.xlu0 %610
        %614 = vset.pattern.permute.xlu0 0
        %615 = vperm.xlu0 %614, %v604
        %v616 = vpop.permute.xlu0 %615
        %619 = vset.pattern.permute.xlu0 0
        %620 = vperm.xlu0 %619, %v605
        %v621 = vpop.permute.xlu0 %620
        %624 = vset.pattern.permute.xlu0 0
        %625 = vperm.xlu0 %624, %v606
        %v626 = vpop.permute.xlu0 %625
        %v628 = vlaneseq
        %v629 = vshrl.u32 %v628, 7
        %v630 = vsub.s32 0, %v629
        %v631 = vrot.slane %v607, %v630
        %v632 = vadd.f32 %v611, %v631
        %v633 = vadd.f32 %v616, %v631
        %v634 = vadd.f32 %v621, %v631
        %v635 = vadd.f32 %v626, %v631
        %v636 = vld [vmem:[%s458] sm:$0xff]
        %v637 = vld [vmem:[%s458 + $0x8] sm:$0xff]
        %v638 = vld [vmem:[%s458 + $0x10] sm:$0xff]
        %v639 = vld [vmem:[%s458 + $0x18] sm:$0xff]
        %v640 = vadd.f32 %v632, %v636
        %v641 = vadd.f32 %v633, %v637
        %v642 = vadd.f32 %v634, %v638
        %v643 = vadd.f32 %v635, %v639
        %vm644 = vcmp.ge.f32.partialorder %v640, 0.0
        %vm645 = vcmp.ge.f32.partialorder %v641, 0.0
        %vm646 = vcmp.ge.f32.partialorder %v642, 0.0
        %vm647 = vcmp.ge.f32.partialorder %v643, 0.0
        %v648 = vmul.f32 %v640, 0.2
        %v649 = vmul.f32 %v641, 0.2
        %v650 = vmul.f32 %v642, 0.2
        %v651 = vmul.f32 %v643, 0.2
        %v652 = vsel %vm644, %v640, %v648
        %v653 = vsel %vm645, %v641, %v649
        %v654 = vsel %vm646, %v642, %v650
        %v655 = vsel %vm647, %v643, %v651
        %v656 = vld [vmem:[%s561] sm:$0xf]
        %v657 = vld [vmem:[%s561 + $0x4] sm:$0xf]
        %v658 = vld [vmem:[%s561 + $0x8] sm:$0xf]
        %v659 = vld [vmem:[%s561 + $0xc] sm:$0xf]
        %v660 = vunpack.c.l.bf16 %v656
        %v661 = vunpack.c.l.bf16 %v657
        %v662 = vunpack.c.l.bf16 %v658
        %v663 = vunpack.c.l.bf16 %v659
        %v664 = vadd.f32 %v652, %v660
        %v665 = vadd.f32 %v653, %v661
        %v666 = vadd.f32 %v654, %v662
        %v667 = vadd.f32 %v655, %v663
        %vm668 = vcmask 261120
        %v669 = vsel %vm668, %v664, -inf
        %670 = vmax.xlane.f32.xlu0 %v669
        %v671 = vpop.xlane.xlu0 %670
        %v672 = vsel %vm668, %v665, -inf
        %673 = vmax.xlane.f32.xlu0 %v672
        %v674 = vpop.xlane.xlu0 %673
        %v675 = vsel %vm668, %v666, -inf
        %676 = vmax.xlane.f32.xlu0 %v675
        %v677 = vpop.xlane.xlu0 %676
        %v678 = vsel %vm668, %v667, -inf
        %679 = vmax.xlane.f32.xlu0 %v678
        %v680 = vpop.xlane.xlu0 %679
        %v681 = vsub.f32 %v664, %v671
        %v682 = vsub.f32 %v665, %v674
        %v683 = vsub.f32 %v666, %v677
        %v684 = vsub.f32 %v667, %v680
        %v685 = vmul.f32 %v681, 1.442695
        %v686 = vpow.pop %v685
        %v687 = vmul.f32 %v682, 1.442695
        %v688 = vpow.pop %v687
        %v689 = vmul.f32 %v683, 1.442695
        %v690 = vpow.pop %v689
        %v691 = vmul.f32 %v684, 1.442695
        %v692 = vpow.pop %v691
        %v693 = vsel %vm668, %v686, 0.0
        %694 = vadd.xlane.f32.xlu0 %v693
        %v695 = vpop.xlane.xlu0 %694
        %v696 = vsel %vm668, %v688, 0.0
        %697 = vadd.xlane.f32.xlu0 %v696
        %v698 = vpop.xlane.xlu0 %697
        %v699 = vsel %vm668, %v690, 0.0
        %700 = vadd.xlane.f32.xlu0 %v699
        %v701 = vpop.xlane.xlu0 %700
        %v702 = vsel %vm668, %v692, 0.0
        %703 = vadd.xlane.f32.xlu0 %v702
        %v704 = vpop.xlane.xlu0 %703
        %v705 = vrcp.pop %v695
        %v706 = vrcp.pop %v698
        %v707 = vrcp.pop %v701
        %v708 = vrcp.pop %v704
        %v709 = vmul.f32 %v686, %v705
        %v710 = vmul.f32 %v688, %v706
        %v711 = vmul.f32 %v690, %v707
        %v712 = vmul.f32 %v692, %v708
        %vm713 = vcmp.lt.f32.partialorder %v664, -5e+11
        %vm714 = vcmp.lt.f32.partialorder %v665, -5e+11
        %vm715 = vcmp.lt.f32.partialorder %v666, -5e+11
        %vm716 = vcmp.lt.f32.partialorder %v667, -5e+11
        %v717 = vsel %vm713, 0.0, %v709
        %v718 = vsel %vm714, 0.0, %v710
        %v719 = vsel %vm715, 0.0, %v711
        %v720 = vsel %vm716, 0.0, %v712
        %721 = vst.msk [vmem:[%s596] sm:$0xff] %vm668, %v717
        %722 = vst.msk [vmem:[%s596 + $0x8] sm:$0xff] %vm668, %v718
        %723 = vst.msk [vmem:[%s596 + $0x10] sm:$0xff] %vm668, %v719
        %724 = vst.msk [vmem:[%s596 + $0x18] sm:$0xff] %vm668, %v720
        %v725 = vpack.c.bf16 %v718, %v717
        %v726 = vpack.c.bf16 %v720, %v719
        %v731 = vunpack.c.l.b16 %v599
        %v732 = vunpack.c.l.b16 %v600
        %v733 = vunpack.c.l.b16 %v601
        %v734 = vunpack.c.l.b16 %v602
        %v735 = vpack.c.b16 %v732, %v731
        %v736 = vpack.c.b16 %v734, %v733
        %v740 = vsel %vm668, %v725, 0
        %v743 = vsel %vm668, %v726, 0
        %745 = vmatprep.subr.bf16.mxu0 0
        %746 = vmatpush1.bf16.msra.mxu0 %v735
        %747 = vmatprep.subr.bf16.mxu0 0
        %748 = vmatpush1.bf16.msra.mxu0 %v736
        %749 = vmatprep.subr.bf16.mxu0 0
        %750 = vmatpush1.bf16.msra.mxu0 0
        %751 = vmatprep.subr.bf16.mxu0 0
        %752 = vmatpush1.bf16.msra.mxu0 0
        %753 = vmatprep.subr.bf16.mxu0 0
        %754 = vmatpush1.bf16.msra.mxu0 0
        %755 = vmatprep.subr.bf16.mxu0 0
        %756 = vmatpush1.bf16.msra.mxu0 0
        %757 = vmatprep.subr.bf16.mxu0 0
        %758 = vmatpush1.bf16.msra.mxu0 0
        %759 = vmatprep.subr.bf16.mxu0 0
        %760 = vmatpush1.bf16.msra.mxu0 0
        %761 = vmatprep.subr.bf16.mxu0 0
        %762 = vmatpush1.bf16.msra.mxu0 0
        %763 = vmatprep.subr.bf16.mxu0 0
        %764 = vmatpush1.bf16.msra.mxu0 0
        %765 = vmatprep.subr.bf16.mxu0 0
        %766 = vmatpush1.bf16.msra.mxu0 0
        %767 = vmatprep.subr.bf16.mxu0 0
        %768 = vmatpush1.bf16.msra.mxu0 0
        %769 = vmatprep.subr.bf16.mxu0 0
        %770 = vmatpush1.bf16.msra.mxu0 0
        %771 = vmatprep.subr.bf16.mxu0 0
        %772 = vmatpush1.bf16.msra.mxu0 0
        %773 = vmatprep.subr.bf16.mxu0 0
        %774 = vmatpush1.bf16.msra.mxu0 0
        %775 = vmatprep.subr.bf16.mxu0 0
        %776 = vmatpush1.bf16.msra.mxu0 0
        %777 = vmatprep.mubr.bf16.mxu0 0
        %778 = vmatmul.mubr.bf16.gmra.mrb[0].mxu0 %v740
        %v779 = vpop.f32.mrb[0].mxu0
        %v780 = vadd.f32 0.0, %v779
        %v781 = vpop.f32.mrb[0].mxu0
        %v782 = vpop.f32.mrb[0].mxu0
        %v783 = vadd.f32 0.0, %v782
        %v784 = vpop.f32.mrb[0].mxu0
        %785 = vmatprep.mubr.bf16.mxu0 0
        %786 = vmatmul.mubr.bf16.gmra.mrb[0].mxu0 %v743
        %v787 = vpop.f32.mrb[0].mxu0
        %v788 = vadd.f32 0.0, %v787
        %v789 = vpop.f32.mrb[0].mxu0
        %v790 = vpop.f32.mrb[0].mxu0
        %v791 = vadd.f32 0.0, %v790
        %v792 = vpop.f32.mrb[0].mxu0
        %793 = vdwg.mxu0
        %vm794 = vcmask 64512
        %795 = vst.msk [vmem:[%s586] sm:$0xff] %vm794, %v780
        %796 = vst.msk [vmem:[%s586 + $0x8] sm:$0xff] %vm794, %v783
        %797 = vst.msk [vmem:[%s586 + $0x10] sm:$0xff] %vm794, %v788
        %798 = vst.msk [vmem:[%s586 + $0x18] sm:$0xff] %vm794, %v791
        %799 = vset.pattern.permute.xlu0 1
        %800 = vperm.xlu0 %799, %v603
        %v801 = vpop.permute.xlu0 %800
        %803 = vset.pattern.permute.xlu0 1
        %804 = vperm.xlu0 %803, %v604
        %v805 = vpop.permute.xlu0 %804
        %807 = vset.pattern.permute.xlu0 1
        %808 = vperm.xlu0 %807, %v605
        %v809 = vpop.permute.xlu0 %808
        %811 = vset.pattern.permute.xlu0 1
        %812 = vperm.xlu0 %811, %v606
        %v813 = vpop.permute.xlu0 %812
        %v815 = vlaneseq
        %v816 = vshrl.u32 %v815, 7
        %v817 = vsub.s32 1, %v816
        %v818 = vrot.slane %v607, %v817
        %v819 = vadd.f32 %v801, %v818
        %v820 = vadd.f32 %v805, %v818
        %v821 = vadd.f32 %v809, %v818
        %v822 = vadd.f32 %v813, %v818
        %s823 = scalar_lea.vmem %s458, 32 [#allocation2]
        %v824 = vld [vmem:[%s823] sm:$0xff]
        %v825 = vld [vmem:[%s823 + $0x8] sm:$0xff]
        %v826 = vld [vmem:[%s823 + $0x10] sm:$0xff]
        %v827 = vld [vmem:[%s823 + $0x18] sm:$0xff]
        %v828 = vadd.f32 %v819, %v824
        %v829 = vadd.f32 %v820, %v825
        %v830 = vadd.f32 %v821, %v826
        %v831 = vadd.f32 %v822, %v827
        %vm832 = vcmp.ge.f32.partialorder %v828, 0.0
        %vm833 = vcmp.ge.f32.partialorder %v829, 0.0
        %vm834 = vcmp.ge.f32.partialorder %v830, 0.0
        %vm835 = vcmp.ge.f32.partialorder %v831, 0.0
        %v836 = vmul.f32 %v828, 0.2
        %v837 = vmul.f32 %v829, 0.2
        %v838 = vmul.f32 %v830, 0.2
        %v839 = vmul.f32 %v831, 0.2
        %v840 = vsel %vm832, %v828, %v836
        %v841 = vsel %vm833, %v829, %v837
        %v842 = vsel %vm834, %v830, %v838
        %v843 = vsel %vm835, %v831, %v839
        %s844 = scalar_lea.vmem %s561, 16
        %v845 = vld [vmem:[%s844] sm:$0xf]
        %v846 = vld [vmem:[%s844 + $0x4] sm:$0xf]
        %v847 = vld [vmem:[%s844 + $0x8] sm:$0xf]
        %v848 = vld [vmem:[%s844 + $0xc] sm:$0xf]
        %v849 = vunpack.c.l.bf16 %v845
        %v850 = vunpack.c.l.bf16 %v846
        %v851 = vunpack.c.l.bf16 %v847
        %v852 = vunpack.c.l.bf16 %v848
        %v853 = vadd.f32 %v840, %v849
        %v854 = vadd.f32 %v841, %v850
        %v855 = vadd.f32 %v842, %v851
        %v856 = vadd.f32 %v843, %v852
        %v857 = vsel %vm668, %v853, -inf
        %858 = vmax.xlane.f32.xlu0 %v857
        %v859 = vpop.xlane.xlu0 %858
        %v860 = vsel %vm668, %v854, -inf
        %861 = vmax.xlane.f32.xlu0 %v860
        %v862 = vpop.xlane.xlu0 %861
        %v863 = vsel %vm668, %v855, -inf
        %864 = vmax.xlane.f32.xlu0 %v863
        %v865 = vpop.xlane.xlu0 %864
        %v866 = vsel %vm668, %v856, -inf
        %867 = vmax.xlane.f32.xlu0 %v866
        %v868 = vpop.xlane.xlu0 %867
        %v869 = vsub.f32 %v853, %v859
        %v870 = vsub.f32 %v854, %v862
        %v871 = vsub.f32 %v855, %v865
        %v872 = vsub.f32 %v856, %v868
        %v873 = vmul.f32 %v869, 1.442695
        %v874 = vpow.pop %v873
        %v875 = vmul.f32 %v870, 1.442695
        %v876 = vpow.pop %v875
        %v877 = vmul.f32 %v871, 1.442695
        %v878 = vpow.pop %v877
        %v879 = vmul.f32 %v872, 1.442695
        %v880 = vpow.pop %v879
        %v881 = vsel %vm668, %v874, 0.0
        %882 = vadd.xlane.f32.xlu0 %v881
        %v883 = vpop.xlane.xlu0 %882
        %v884 = vsel %vm668, %v876, 0.0
        %885 = vadd.xlane.f32.xlu0 %v884
        %v886 = vpop.xlane.xlu0 %885
        %v887 = vsel %vm668, %v878, 0.0
        %888 = vadd.xlane.f32.xlu0 %v887
        %v889 = vpop.xlane.xlu0 %888
        %v890 = vsel %vm668, %v880, 0.0
        %891 = vadd.xlane.f32.xlu0 %v890
        %v892 = vpop.xlane.xlu0 %891
        %v893 = vrcp.pop %v883
        %v894 = vrcp.pop %v886
        %v895 = vrcp.pop %v889
        %v896 = vrcp.pop %v892
        %v897 = vmul.f32 %v874, %v893
        %v898 = vmul.f32 %v876, %v894
        %v899 = vmul.f32 %v878, %v895
        %v900 = vmul.f32 %v880, %v896
        %vm901 = vcmp.lt.f32.partialorder %v853, -5e+11
        %vm902 = vcmp.lt.f32.partialorder %v854, -5e+11
        %vm903 = vcmp.lt.f32.partialorder %v855, -5e+11
        %vm904 = vcmp.lt.f32.partialorder %v856, -5e+11
        %v905 = vsel %vm901, 0.0, %v897
        %v906 = vsel %vm902, 0.0, %v898
        %v907 = vsel %vm903, 0.0, %v899
        %v908 = vsel %vm904, 0.0, %v900
        %s909 = scalar_lea.vmem %s596, 32
        %910 = vst.msk [vmem:[%s909] sm:$0xff] %vm668, %v905
        %911 = vst.msk [vmem:[%s909 + $0x8] sm:$0xff] %vm668, %v906
        %912 = vst.msk [vmem:[%s909 + $0x10] sm:$0xff] %vm668, %v907
        %913 = vst.msk [vmem:[%s909 + $0x18] sm:$0xff] %vm668, %v908
        %v914 = vpack.c.bf16 %v906, %v905
        %v915 = vpack.c.bf16 %v908, %v907
        %916 = vrot.lane.b32.xlu0 %v735, 120
        %v917 = vpop.permute.xlu0 %916
        %918 = vrot.lane.b32.xlu0 %v736, 120
        %v919 = vpop.permute.xlu0 %918
        %v923 = vsel %vm668, %v914, 0
        %v926 = vsel %vm668, %v915, 0
        %928 = vmatprep.subr.bf16.mxu0 0
        %929 = vmatpush1.bf16.msra.mxu0 %v917
        %930 = vmatprep.subr.bf16.mxu0 0
        %931 = vmatpush1.bf16.msra.mxu0 %v919
        %932 = vmatprep.subr.bf16.mxu0 0
        %933 = vmatpush1.bf16.msra.mxu0 0
        %934 = vmatprep.subr.bf16.mxu0 0
        %935 = vmatpush1.bf16.msra.mxu0 0
        %936 = vmatprep.subr.bf16.mxu0 0
        %937 = vmatpush1.bf16.msra.mxu0 0
        %938 = vmatprep.subr.bf16.mxu0 0
        %939 = vmatpush1.bf16.msra.mxu0 0
        %940 = vmatprep.subr.bf16.mxu0 0
        %941 = vmatpush1.bf16.msra.mxu0 0
        %942 = vmatprep.subr.bf16.mxu0 0
        %943 = vmatpush1.bf16.msra.mxu0 0
        %944 = vmatprep.subr.bf16.mxu0 0
        %945 = vmatpush1.bf16.msra.mxu0 0
        %946 = vmatprep.subr.bf16.mxu0 0
        %947 = vmatpush1.bf16.msra.mxu0 0
        %948 = vmatprep.subr.bf16.mxu0 0
        %949 = vmatpush1.bf16.msra.mxu0 0
        %950 = vmatprep.subr.bf16.mxu0 0
        %951 = vmatpush1.bf16.msra.mxu0 0
        %952 = vmatprep.subr.bf16.mxu0 0
        %953 = vmatpush1.bf16.msra.mxu0 0
        %954 = vmatprep.subr.bf16.mxu0 0
        %955 = vmatpush1.bf16.msra.mxu0 0
        %956 = vmatprep.subr.bf16.mxu0 0
        %957 = vmatpush1.bf16.msra.mxu0 0
        %958 = vmatprep.subr.bf16.mxu0 0
        %959 = vmatpush1.bf16.msra.mxu0 0
        %960 = vmatprep.mubr.bf16.mxu0 0
        %961 = vmatmul.mubr.bf16.gmra.mrb[0].mxu0 %v923
        %v962 = vpop.f32.mrb[0].mxu0
        %v963 = vadd.f32 0.0, %v962
        %v964 = vpop.f32.mrb[0].mxu0
        %v965 = vpop.f32.mrb[0].mxu0
        %v966 = vadd.f32 0.0, %v965
        %v967 = vpop.f32.mrb[0].mxu0
        %968 = vmatprep.mubr.bf16.mxu0 0
        %969 = vmatmul.mubr.bf16.gmra.mrb[0].mxu0 %v926
        %v970 = vpop.f32.mrb[0].mxu0
        %v971 = vadd.f32 0.0, %v970
        %v972 = vpop.f32.mrb[0].mxu0
        %v973 = vpop.f32.mrb[0].mxu0
        %v974 = vadd.f32 0.0, %v973
        %v975 = vpop.f32.mrb[0].mxu0
        %976 = vdwg.mxu0
        %981 = vrot.lane.b32.xlu0 %v963, 8
        %v982 = vpop.permute.xlu0 %981
        %983 = vrot.lane.b32.xlu0 %v966, 8
        %v984 = vpop.permute.xlu0 %983
        %985 = vrot.lane.b32.xlu0 %v971, 8
        %v986 = vpop.permute.xlu0 %985
        %987 = vrot.lane.b32.xlu0 %v974, 8
        %v988 = vpop.permute.xlu0 %987
        %vm993 = vcmask 130112
        %994 = vst.msk [vmem:[%s586] sm:$0xff] %vm993, %v982
        %995 = vst.msk [vmem:[%s586 + $0x8] sm:$0xff] %vm993, %v984
        %996 = vst.msk [vmem:[%s586 + $0x10] sm:$0xff] %vm993, %v986
        %997 = vst.msk [vmem:[%s586 + $0x18] sm:$0xff] %vm993, %v988
        %998 = vset.pattern.permute.xlu0 2
        %999 = vperm.xlu0 %998, %v603
        %v1000 = vpop.permute.xlu0 %999
        %1002 = vset.pattern.permute.xlu0 2
        %1003 = vperm.xlu0 %1002, %v604
        %v1004 = vpop.permute.xlu0 %1003
        %1006 = vset.pattern.permute.xlu0 2
        %1007 = vperm.xlu0 %1006, %v605
        %v1008 = vpop.permute.xlu0 %1007
        %1010 = vset.pattern.permute.xlu0 2
        %1011 = vperm.xlu0 %1010, %v606
        %v1012 = vpop.permute.xlu0 %1011
        %v1014 = vlaneseq
        %v1015 = vshrl.u32 %v1014, 7
        %v1016 = vsub.s32 2, %v1015
        %v1017 = vrot.slane %v607, %v1016
        %v1018 = vadd.f32 %v1000, %v1017
        %v1019 = vadd.f32 %v1004, %v1017
        %v1020 = vadd.f32 %v1008, %v1017
        %v1021 = vadd.f32 %v1012, %v1017
        %s1022 = scalar_lea.vmem %s458, 64 [#allocation2]
        %v1023 = vld [vmem:[%s1022] sm:$0xff]
        %v1024 = vld [vmem:[%s1022 + $0x8] sm:$0xff]
        %v1025 = vld [vmem:[%s1022 + $0x10] sm:$0xff]
        %v1026 = vld [vmem:[%s1022 + $0x18] sm:$0xff]
        %v1027 = vadd.f32 %v1018, %v1023
        %v1028 = vadd.f32 %v1019, %v1024
        %v1029 = vadd.f32 %v1020, %v1025
        %v1030 = vadd.f32 %v1021, %v1026
        %vm1031 = vcmp.ge.f32.partialorder %v1027, 0.0
        %vm1032 = vcmp.ge.f32.partialorder %v1028, 0.0
        %vm1033 = vcmp.ge.f32.partialorder %v1029, 0.0
        %vm1034 = vcmp.ge.f32.partialorder %v1030, 0.0
        %v1035 = vmul.f32 %v1027, 0.2
        %v1036 = vmul.f32 %v1028, 0.2
        %v1037 = vmul.f32 %v1029, 0.2
        %v1038 = vmul.f32 %v1030, 0.2
        %v1039 = vsel %vm1031, %v1027, %v1035
        %v1040 = vsel %vm1032, %v1028, %v1036
        %v1041 = vsel %vm1033, %v1029, %v1037
        %v1042 = vsel %vm1034, %v1030, %v1038
        %s1043 = scalar_lea.vmem %s561, 32
        %v1044 = vld [vmem:[%s1043] sm:$0xf]
        %v1045 = vld [vmem:[%s1043 + $0x4] sm:$0xf]
        %v1046 = vld [vmem:[%s1043 + $0x8] sm:$0xf]
        %v1047 = vld [vmem:[%s1043 + $0xc] sm:$0xf]
        %v1048 = vunpack.c.l.bf16 %v1044
        %v1049 = vunpack.c.l.bf16 %v1045
        %v1050 = vunpack.c.l.bf16 %v1046
        %v1051 = vunpack.c.l.bf16 %v1047
        %v1052 = vadd.f32 %v1039, %v1048
        %v1053 = vadd.f32 %v1040, %v1049
        %v1054 = vadd.f32 %v1041, %v1050
        %v1055 = vadd.f32 %v1042, %v1051
        %v1056 = vsel %vm668, %v1052, -inf
        %1057 = vmax.xlane.f32.xlu0 %v1056
        %v1058 = vpop.xlane.xlu0 %1057
        %v1059 = vsel %vm668, %v1053, -inf
        %1060 = vmax.xlane.f32.xlu0 %v1059
        %v1061 = vpop.xlane.xlu0 %1060
        %v1062 = vsel %vm668, %v1054, -inf
        %1063 = vmax.xlane.f32.xlu0 %v1062
        %v1064 = vpop.xlane.xlu0 %1063
        %v1065 = vsel %vm668, %v1055, -inf
        %1066 = vmax.xlane.f32.xlu0 %v1065
        %v1067 = vpop.xlane.xlu0 %1066
        %v1068 = vsub.f32 %v1052, %v1058
        %v1069 = vsub.f32 %v1053, %v1061
        %v1070 = vsub.f32 %v1054, %v1064
        %v1071 = vsub.f32 %v1055, %v1067
        %v1072 = vmul.f32 %v1068, 1.442695
        %v1073 = vpow.pop %v1072
        %v1074 = vmul.f32 %v1069, 1.442695
        %v1075 = vpow.pop %v1074
        %v1076 = vmul.f32 %v1070, 1.442695
        %v1077 = vpow.pop %v1076
        %v1078 = vmul.f32 %v1071, 1.442695
        %v1079 = vpow.pop %v1078
        %v1080 = vsel %vm668, %v1073, 0.0
        %1081 = vadd.xlane.f32.xlu0 %v1080
        %v1082 = vpop.xlane.xlu0 %1081
        %v1083 = vsel %vm668, %v1075, 0.0
        %1084 = vadd.xlane.f32.xlu0 %v1083
        %v1085 = vpop.xlane.xlu0 %1084
        %v1086 = vsel %vm668, %v1077, 0.0
        %1087 = vadd.xlane.f32.xlu0 %v1086
        %v1088 = vpop.xlane.xlu0 %1087
        %v1089 = vsel %vm668, %v1079, 0.0
        %1090 = vadd.xlane.f32.xlu0 %v1089
        %v1091 = vpop.xlane.xlu0 %1090
        %v1092 = vrcp.pop %v1082
        %v1093 = vrcp.pop %v1085
        %v1094 = vrcp.pop %v1088
        %v1095 = vrcp.pop %v1091
        %v1096 = vmul.f32 %v1073, %v1092
        %v1097 = vmul.f32 %v1075, %v1093
        %v1098 = vmul.f32 %v1077, %v1094
        %v1099 = vmul.f32 %v1079, %v1095
        %vm1100 = vcmp.lt.f32.partialorder %v1052, -5e+11
        %vm1101 = vcmp.lt.f32.partialorder %v1053, -5e+11
        %vm1102 = vcmp.lt.f32.partialorder %v1054, -5e+11
        %vm1103 = vcmp.lt.f32.partialorder %v1055, -5e+11
        %v1104 = vsel %vm1100, 0.0, %v1096
        %v1105 = vsel %vm1101, 0.0, %v1097
        %v1106 = vsel %vm1102, 0.0, %v1098
        %v1107 = vsel %vm1103, 0.0, %v1099
        %s1108 = scalar_lea.vmem %s596, 64
        %1109 = vst.msk [vmem:[%s1108] sm:$0xff] %vm668, %v1104
        %1110 = vst.msk [vmem:[%s1108 + $0x8] sm:$0xff] %vm668, %v1105
        %1111 = vst.msk [vmem:[%s1108 + $0x10] sm:$0xff] %vm668, %v1106
        %1112 = vst.msk [vmem:[%s1108 + $0x18] sm:$0xff] %vm668, %v1107
        %v1113 = vpack.c.bf16 %v1105, %v1104
        %v1114 = vpack.c.bf16 %v1107, %v1106
        %1115 = vrot.lane.b32.xlu0 %v735, 112
        %v1116 = vpop.permute.xlu0 %1115
        %1117 = vrot.lane.b32.xlu0 %v736, 112
        %v1118 = vpop.permute.xlu0 %1117
        %v1122 = vsel %vm668, %v1113, 0
        %v1125 = vsel %vm668, %v1114, 0
        %1127 = vmatprep.subr.bf16.mxu0 0
        %1128 = vmatpush1.bf16.msra.mxu0 %v1116
        %1129 = vmatprep.subr.bf16.mxu0 0
        %1130 = vmatpush1.bf16.msra.mxu0 %v1118
        %1131 = vmatprep.subr.bf16.mxu0 0
        %1132 = vmatpush1.bf16.msra.mxu0 0
        %1133 = vmatprep.subr.bf16.mxu0 0
        %1134 = vmatpush1.bf16.msra.mxu0 0
        %1135 = vmatprep.subr.bf16.mxu0 0
        %1136 = vmatpush1.bf16.msra.mxu0 0
        %1137 = vmatprep.subr.bf16.mxu0 0
        %1138 = vmatpush1.bf16.msra.mxu0 0
        %1139 = vmatprep.subr.bf16.mxu0 0
        %1140 = vmatpush1.bf16.msra.mxu0 0
        %1141 = vmatprep.subr.bf16.mxu0 0
        %1142 = vmatpush1.bf16.msra.mxu0 0
        %1143 = vmatprep.subr.bf16.mxu0 0
        %1144 = vmatpush1.bf16.msra.mxu0 0
        %1145 = vmatprep.subr.bf16.mxu0 0
        %1146 = vmatpush1.bf16.msra.mxu0 0
        %1147 = vmatprep.subr.bf16.mxu0 0
        %1148 = vmatpush1.bf16.msra.mxu0 0
        %1149 = vmatprep.subr.bf16.mxu0 0
        %1150 = vmatpush1.bf16.msra.mxu0 0
        %1151 = vmatprep.subr.bf16.mxu0 0
        %1152 = vmatpush1.bf16.msra.mxu0 0
        %1153 = vmatprep.subr.bf16.mxu0 0
        %1154 = vmatpush1.bf16.msra.mxu0 0
        %1155 = vmatprep.subr.bf16.mxu0 0
        %1156 = vmatpush1.bf16.msra.mxu0 0
        %1157 = vmatprep.subr.bf16.mxu0 0
        %1158 = vmatpush1.bf16.msra.mxu0 0
        %1159 = vmatprep.mubr.bf16.mxu0 0
        %1160 = vmatmul.mubr.bf16.gmra.mrb[0].mxu0 %v1122
        %v1161 = vpop.f32.mrb[0].mxu0
        %v1162 = vadd.f32 0.0, %v1161
        %v1163 = vpop.f32.mrb[0].mxu0
        %v1164 = vpop.f32.mrb[0].mxu0
        %v1165 = vadd.f32 0.0, %v1164
        %v1166 = vpop.f32.mrb[0].mxu0
        %1167 = vmatprep.mubr.bf16.mxu0 0
        %1168 = vmatmul.mubr.bf16.gmra.mrb[0].mxu0 %v1125
        %v1169 = vpop.f32.mrb[0].mxu0
        %v1170 = vadd.f32 0.0, %v1169
        %v1171 = vpop.f32.mrb[0].mxu0
        %v1172 = vpop.f32.mrb[0].mxu0
        %v1173 = vadd.f32 0.0, %v1172
        %v1174 = vpop.f32.mrb[0].mxu0
        %1175 = vdwg.mxu0
        %1180 = vrot.lane.b32.xlu0 %v1162, 16
        %v1181 = vpop.permute.xlu0 %1180
        %1182 = vrot.lane.b32.xlu0 %v1165, 16
        %v1183 = vpop.permute.xlu0 %1182
        %1184 = vrot.lane.b32.xlu0 %v1170, 16
        %v1185 = vpop.permute.xlu0 %1184
        %1186 = vrot.lane.b32.xlu0 %v1173, 16
        %v1187 = vpop.permute.xlu0 %1186
        %vm1192 = vcmask 195712
        %1193 = vst.msk [vmem:[%s586] sm:$0xff] %vm1192, %v1181
        %1194 = vst.msk [vmem:[%s586 + $0x8] sm:$0xff] %vm1192, %v1183
        %1195 = vst.msk [vmem:[%s586 + $0x10] sm:$0xff] %vm1192, %v1185
        %1196 = vst.msk [vmem:[%s586 + $0x18] sm:$0xff] %vm1192, %v1187
        %1197 = vset.pattern.permute.xlu0 3
        %1198 = vperm.xlu0 %1197, %v603
        %v1199 = vpop.permute.xlu0 %1198
        %1201 = vset.pattern.permute.xlu0 3
        %1202 = vperm.xlu0 %1201, %v604
        %v1203 = vpop.permute.xlu0 %1202
        %1205 = vset.pattern.permute.xlu0 3
        %1206 = vperm.xlu0 %1205, %v605
        %v1207 = vpop.permute.xlu0 %1206
        %1209 = vset.pattern.permute.xlu0 3
        %1210 = vperm.xlu0 %1209, %v606
        %v1211 = vpop.permute.xlu0 %1210
        %v1213 = vlaneseq
        %v1214 = vshrl.u32 %v1213, 7
        %v1215 = vsub.s32 3, %v1214
        %v1216 = vrot.slane %v607, %v1215
        %v1217 = vadd.f32 %v1199, %v1216
        %v1218 = vadd.f32 %v1203, %v1216
        %v1219 = vadd.f32 %v1207, %v1216
        %v1220 = vadd.f32 %v1211, %v1216
        %s1221 = scalar_lea.vmem %s458, 96 [#allocation2]
        %v1222 = vld [vmem:[%s1221] sm:$0xff]
        %v1223 = vld [vmem:[%s1221 + $0x8] sm:$0xff]
        %v1224 = vld [vmem:[%s1221 + $0x10] sm:$0xff]
        %v1225 = vld [vmem:[%s1221 + $0x18] sm:$0xff]
        %v1226 = vadd.f32 %v1217, %v1222
        %v1227 = vadd.f32 %v1218, %v1223
        %v1228 = vadd.f32 %v1219, %v1224
        %v1229 = vadd.f32 %v1220, %v1225
        %vm1230 = vcmp.ge.f32.partialorder %v1226, 0.0
        %vm1231 = vcmp.ge.f32.partialorder %v1227, 0.0
        %vm1232 = vcmp.ge.f32.partialorder %v1228, 0.0
        %vm1233 = vcmp.ge.f32.partialorder %v1229, 0.0
        %v1234 = vmul.f32 %v1226, 0.2
        %v1235 = vmul.f32 %v1227, 0.2
        %v1236 = vmul.f32 %v1228, 0.2
        %v1237 = vmul.f32 %v1229, 0.2
        %v1238 = vsel %vm1230, %v1226, %v1234
        %v1239 = vsel %vm1231, %v1227, %v1235
        %v1240 = vsel %vm1232, %v1228, %v1236
        %v1241 = vsel %vm1233, %v1229, %v1237
        %s1242 = scalar_lea.vmem %s561, 48
        %v1243 = vld [vmem:[%s1242] sm:$0xf]
        %v1244 = vld [vmem:[%s1242 + $0x4] sm:$0xf]
        %v1245 = vld [vmem:[%s1242 + $0x8] sm:$0xf]
        %v1246 = vld [vmem:[%s1242 + $0xc] sm:$0xf]
        %v1247 = vunpack.c.l.bf16 %v1243
        %v1248 = vunpack.c.l.bf16 %v1244
        %v1249 = vunpack.c.l.bf16 %v1245
        %v1250 = vunpack.c.l.bf16 %v1246
        %v1251 = vadd.f32 %v1238, %v1247
        %v1252 = vadd.f32 %v1239, %v1248
        %v1253 = vadd.f32 %v1240, %v1249
        %v1254 = vadd.f32 %v1241, %v1250
        %v1255 = vsel %vm668, %v1251, -inf
        %1256 = vmax.xlane.f32.xlu0 %v1255
        %v1257 = vpop.xlane.xlu0 %1256
        %v1258 = vsel %vm668, %v1252, -inf
        %1259 = vmax.xlane.f32.xlu0 %v1258
        %v1260 = vpop.xlane.xlu0 %1259
        %v1261 = vsel %vm668, %v1253, -inf
        %1262 = vmax.xlane.f32.xlu0 %v1261
        %v1263 = vpop.xlane.xlu0 %1262
        %v1264 = vsel %vm668, %v1254, -inf
        %1265 = vmax.xlane.f32.xlu0 %v1264
        %v1266 = vpop.xlane.xlu0 %1265
        %v1267 = vsub.f32 %v1251, %v1257
        %v1268 = vsub.f32 %v1252, %v1260
        %v1269 = vsub.f32 %v1253, %v1263
        %v1270 = vsub.f32 %v1254, %v1266
        %v1271 = vmul.f32 %v1267, 1.442695
        %v1272 = vpow.pop %v1271
        %v1273 = vmul.f32 %v1268, 1.442695
        %v1274 = vpow.pop %v1273
        %v1275 = vmul.f32 %v1269, 1.442695
        %v1276 = vpow.pop %v1275
        %v1277 = vmul.f32 %v1270, 1.442695
        %v1278 = vpow.pop %v1277
        %v1279 = vsel %vm668, %v1272, 0.0
        %1280 = vadd.xlane.f32.xlu0 %v1279
        %v1281 = vpop.xlane.xlu0 %1280
        %v1282 = vsel %vm668, %v1274, 0.0
        %1283 = vadd.xlane.f32.xlu0 %v1282
        %v1284 = vpop.xlane.xlu0 %1283
        %v1285 = vsel %vm668, %v1276, 0.0
        %1286 = vadd.xlane.f32.xlu0 %v1285
        %v1287 = vpop.xlane.xlu0 %1286
        %v1288 = vsel %vm668, %v1278, 0.0
        %1289 = vadd.xlane.f32.xlu0 %v1288
        %v1290 = vpop.xlane.xlu0 %1289
        %v1291 = vrcp.pop %v1281
        %v1292 = vrcp.pop %v1284
        %v1293 = vrcp.pop %v1287
        %v1294 = vrcp.pop %v1290
        %v1295 = vmul.f32 %v1272, %v1291
        %v1296 = vmul.f32 %v1274, %v1292
        %v1297 = vmul.f32 %v1276, %v1293
        %v1298 = vmul.f32 %v1278, %v1294
        %vm1299 = vcmp.lt.f32.partialorder %v1251, -5e+11
        %vm1300 = vcmp.lt.f32.partialorder %v1252, -5e+11
        %vm1301 = vcmp.lt.f32.partialorder %v1253, -5e+11
        %vm1302 = vcmp.lt.f32.partialorder %v1254, -5e+11
        %v1303 = vsel %vm1299, 0.0, %v1295
        %v1304 = vsel %vm1300, 0.0, %v1296
        %v1305 = vsel %vm1301, 0.0, %v1297
        %v1306 = vsel %vm1302, 0.0, %v1298
        %s1307 = scalar_lea.vmem %s596, 96
        %1308 = vst.msk [vmem:[%s1307] sm:$0xff] %vm668, %v1303
        %1309 = vst.msk [vmem:[%s1307 + $0x8] sm:$0xff] %vm668, %v1304
        %1310 = vst.msk [vmem:[%s1307 + $0x10] sm:$0xff] %vm668, %v1305
        %1311 = vst.msk [vmem:[%s1307 + $0x18] sm:$0xff] %vm668, %v1306
        %v1312 = vpack.c.bf16 %v1304, %v1303
        %v1313 = vpack.c.bf16 %v1306, %v1305
        %1314 = vrot.lane.b32.xlu0 %v735, 104
        %v1315 = vpop.permute.xlu0 %1314
        %1316 = vrot.lane.b32.xlu0 %v736, 104
        %v1317 = vpop.permute.xlu0 %1316
        %v1321 = vsel %vm668, %v1312, 0
        %v1324 = vsel %vm668, %v1313, 0
        %1326 = vmatprep.subr.bf16.mxu0 0
        %1327 = vmatpush1.bf16.msra.mxu0 %v1315
        %1328 = vmatprep.subr.bf16.mxu0 0
        %1329 = vmatpush1.bf16.msra.mxu0 %v1317
        %1330 = vmatprep.subr.bf16.mxu0 0
        %1331 = vmatpush1.bf16.msra.mxu0 0
        %1332 = vmatprep.subr.bf16.mxu0 0
        %1333 = vmatpush1.bf16.msra.mxu0 0
        %1334 = vmatprep.subr.bf16.mxu0 0
        %1335 = vmatpush1.bf16.msra.mxu0 0
        %1336 = vmatprep.subr.bf16.mxu0 0
        %1337 = vmatpush1.bf16.msra.mxu0 0
        %1338 = vmatprep.subr.bf16.mxu0 0
        %1339 = vmatpush1.bf16.msra.mxu0 0
        %1340 = vmatprep.subr.bf16.mxu0 0
        %1341 = vmatpush1.bf16.msra.mxu0 0
        %1342 = vmatprep.subr.bf16.mxu0 0
        %1343 = vmatpush1.bf16.msra.mxu0 0
        %1344 = vmatprep.subr.bf16.mxu0 0
        %1345 = vmatpush1.bf16.msra.mxu0 0
        %1346 = vmatprep.subr.bf16.mxu0 0
        %1347 = vmatpush1.bf16.msra.mxu0 0
        %1348 = vmatprep.subr.bf16.mxu0 0
        %1349 = vmatpush1.bf16.msra.mxu0 0
        %1350 = vmatprep.subr.bf16.mxu0 0
        %1351 = vmatpush1.bf16.msra.mxu0 0
        %1352 = vmatprep.subr.bf16.mxu0 0
        %1353 = vmatpush1.bf16.msra.mxu0 0
        %1354 = vmatprep.subr.bf16.mxu0 0
        %1355 = vmatpush1.bf16.msra.mxu0 0
        %1356 = vmatprep.subr.bf16.mxu0 0
        %1357 = vmatpush1.bf16.msra.mxu0 0
        %1358 = vmatprep.mubr.bf16.mxu0 0
        %1359 = vmatmul.mubr.bf16.gmra.mrb[0].mxu0 %v1321
        %v1360 = vpop.f32.mrb[0].mxu0
        %v1361 = vadd.f32 0.0, %v1360
        %v1362 = vpop.f32.mrb[0].mxu0
        %v1363 = vpop.f32.mrb[0].mxu0
        %v1364 = vadd.f32 0.0, %v1363
        %v1365 = vpop.f32.mrb[0].mxu0
        %1366 = vmatprep.mubr.bf16.mxu0 0
        %1367 = vmatmul.mubr.bf16.gmra.mrb[0].mxu0 %v1324
        %v1368 = vpop.f32.mrb[0].mxu0
        %v1369 = vadd.f32 0.0, %v1368
        %v1370 = vpop.f32.mrb[0].mxu0
        %v1371 = vpop.f32.mrb[0].mxu0
        %v1372 = vadd.f32 0.0, %v1371
        %v1373 = vpop.f32.mrb[0].mxu0
        %1374 = vdwg.mxu0
        %1379 = vrot.lane.b32.xlu0 %v1361, 24
        %v1380 = vpop.permute.xlu0 %1379
        %1381 = vrot.lane.b32.xlu0 %v1364, 24
        %v1382 = vpop.permute.xlu0 %1381
        %1383 = vrot.lane.b32.xlu0 %v1369, 24
        %v1384 = vpop.permute.xlu0 %1383
        %1385 = vrot.lane.b32.xlu0 %v1372, 24
        %v1386 = vpop.permute.xlu0 %1385
        %vm1391 = vcmask 261312
        %1392 = vst.msk [vmem:[%s586] sm:$0xff] %vm1391, %v1380
        %1393 = vst.msk [vmem:[%s586 + $0x8] sm:$0xff] %vm1391, %v1382
        %1394 = vst.msk [vmem:[%s586 + $0x10] sm:$0xff] %vm1391, %v1384
        %1395 = vst.msk [vmem:[%s586 + $0x18] sm:$0xff] %vm1391, %v1386
        %v1396 = vld [vmem:[%s586] sm:$0xff]
        %v1397 = vld [vmem:[%s586 + $0x8] sm:$0xff]
        %v1398 = vld [vmem:[%s586 + $0x10] sm:$0xff]
        %v1399 = vld [vmem:[%s586 + $0x18] sm:$0xff]
        %v1400 = vld [vmem:[%s576] sm:$0xff]
        %v1401 = vld [vmem:[%s576 + $0x8] sm:$0xff]
        %v1402 = vld [vmem:[%s576 + $0x10] sm:$0xff]
        %v1403 = vld [vmem:[%s576 + $0x18] sm:$0xff]
        %v1404 = vadd.f32 %v1396, %v1400
        %v1405 = vadd.f32 %v1397, %v1401
        %v1406 = vadd.f32 %v1398, %v1402
        %v1407 = vadd.f32 %v1399, %v1403
        %v1408 = vld [vmem:[%s6] sm:$0x1]
        %v1410 = vlaneseq
        %v1411 = vshrl.u32 %v1410, 7
        %v1412 = vsub.s32 0, %v1411
        %v1413 = vrot.slane %v1408, %v1412
        %v1415 = vadd.f32 %v1404, %v1413
        %v1416 = vadd.f32 %v1405, %v1413
        %v1417 = vadd.f32 %v1406, %v1413
        %v1418 = vadd.f32 %v1407, %v1413
        %1419 = vst.msk [vmem:[%s586] sm:$0xff] %vm668, %v1415
        %1420 = vst.msk [vmem:[%s586 + $0x8] sm:$0xff] %vm668, %v1416
        %1421 = vst.msk [vmem:[%s586 + $0x10] sm:$0xff] %vm668, %v1417
        %1422 = vst.msk [vmem:[%s586 + $0x18] sm:$0xff] %vm668, %v1418
        %s1423 = smul.u32 4, %s25
        %p1424 = scmp.lt.s32.totalorder %s24, 1
        %s1425 = scalar_select %p1424, %s24, 1
        %p1426 = scmp.lt.s32.totalorder %s1423, 3
        %s1427 = scalar_select %p1426, %s1423, 3
        %s1428 = smul.addr %s1425, 4
        %s1429 = sadd.s32 %s1427, %s1428
        %s1430 = smul.addr %s1429, 8
        %s1431 = scalar_lea.vmem %s7, %s1430
        %s1432 = smul.u32 4, %s25
        %p1433 = scmp.lt.s32.totalorder %s24, 1
        %s1434 = scalar_select %p1433, %s24, 1
        %p1435 = scmp.lt.s32.totalorder %s1432, 3
        %s1436 = scalar_select %p1435, %s1432, 3
        %s1437 = smul.addr %s1434, 16
        %s1438 = sadd.s32 %s1436, %s1437
        %s1439 = smul.addr %s1438, 8
        %s1440 = scalar_lea.vmem %s8, %s1439
        // Predicated region
        $region87: #{heterogeneous_gat.1} parent=81 // pred_check
          %p1441 = pneg %p237
        $region88: #{heterogeneous_gat.1} parent=81 // pred_check_branch
          %1443 = sbr.rel (%p1441) target = $region90
        $region89: #{heterogeneous_gat.1} parent=81 // pred_region
          %s1444 = smul.u32 4, %s25
        $region90: #{heterogeneous_gat.1} parent=81 // pred_fallthru
          _
        // Predicated region
        $region91: #{heterogeneous_gat.1} parent=81 // pred_check
          %p1445 = pneg %p265
        $region92: #{heterogeneous_gat.1} parent=81 // pred_check_branch
          %1447 = sbr.rel (%p1445) target = $region94
        $region93: #{heterogeneous_gat.1} parent=81 // pred_region
          %s1448 = smul.u32 4, %s25
        $region94: #{heterogeneous_gat.1} parent=81 // pred_fallthru
          _
      $region82: #{heterogeneous_gat.1} parent=5 // pred_fallthru
        _
      %p1449 = scmp.le.s32.totalorder 2, %s15
      // Predicated region
      $region95: #{heterogeneous_gat.1} parent=5 // pred_check
        %p1450 = pneg %p1449
      $region96: #{heterogeneous_gat.1} parent=5 // pred_check_branch
        %1452 = sbr.rel (%p1450) target = $region98
      $region97: #{heterogeneous_gat.1} parent=5 // pred_region
        %s1453 = ssub.s32 %s15, 2
        // Predicated region
        $region99: #{heterogeneous_gat.1} parent=97 // pred_check
          %p1454 = pneg %p243
        $region100: #{heterogeneous_gat.1} parent=97 // pred_check_branch
          %1456 = sbr.rel (%p1454) target = $region102
        $region101: #{heterogeneous_gat.1} parent=97 // pred_region
          %s1457 = smul.u32 4, %s27
          %p1458 = scmp.lt.s32.totalorder %s26, 1
          %s1459 = scalar_select %p1458, %s26, 1
          %p1460 = scmp.lt.s32.totalorder %s1457, 3
          %s1461 = scalar_select %p1460, %s1457, 3
          %s1462 = smul.addr %s1459, 4
          %s1463 = sadd.s32 %s1461, %s1462
          %s1464 = smul.addr %s1463, 8
          %s1465 = scalar_lea.vmem %s7, %s1464
        $region102: #{heterogeneous_gat.1} parent=97 // pred_fallthru
          _
        // Predicated region
        $region103: #{heterogeneous_gat.1} parent=97 // pred_check
          %p1466 = pneg %p271
        $region104: #{heterogeneous_gat.1} parent=97 // pred_check_branch
          %1468 = sbr.rel (%p1466) target = $region106
        $region105: #{heterogeneous_gat.1} parent=97 // pred_region
          %s1469 = smul.u32 4, %s27
          %p1470 = scmp.lt.s32.totalorder %s26, 1
          %s1471 = scalar_select %p1470, %s26, 1
          %p1472 = scmp.lt.s32.totalorder %s1469, 3
          %s1473 = scalar_select %p1472, %s1469, 3
          %s1474 = smul.addr %s1471, 16
          %s1475 = sadd.s32 %s1473, %s1474
          %s1476 = smul.addr %s1475, 8
          %s1477 = scalar_lea.vmem %s8, %s1476
        $region106: #{heterogeneous_gat.1} parent=97 // pred_fallthru
          _
      $region98: #{heterogeneous_gat.1} parent=5 // pred_fallthru
        _
    $region6: #{heterogeneous_gat.1} parent=1 // loop_footer
      %s19 = sadd.s32 1, %s15
    $region7: #{heterogeneous_gat.1} parent=1 // loop_footer_branch
      %14 = sbr.rel target = $region3
    $region8: #{heterogeneous_gat.1} parent=1 // loop_exit
      _

</llo_original>
